<compile_context>
chip_gen: v5e
topology: v5e:2x2
jax: 0.10.0
libtpu: 0.0.40
codegen_flags: <defaults>
</compile_context>

<pallas_src>
import jax
import jax.numpy as jnp
from jax import lax
from jax.experimental import pallas as pl
from jax.experimental.pallas import tpu as pltpu

TM_MM = 256   # GEMM row tile (fills the 2x256x256 MXU on v6e/v7x; fine on v5e)
TK_MAX = 512  # GEMM K tile cap (bounds resident weight block for v7x VMEM)
TM_EW = 512   # row tile for memory-bound elementwise / BN kernel


def _round_up(x, m):
    return (x + m - 1) // m * m


def _pad2(a, rows, cols):
    return jnp.pad(a, ((0, rows - a.shape[0]), (0, cols - a.shape[1])))


# ----------------------------------------------------------------------------
# Kernel 1: K-tiled bf16 GEMM with fused per-channel sum / sum-of-squares.
#   grid = (M tiles, K tiles); f32 accumulator scratch; stats output is a
#   resident (16, Cp) accumulator (rows 0-7 = partial sums, 8-15 = partial
#   sums of squares, kept 8-sublane dense so stores are unmasked).
# ----------------------------------------------------------------------------
def _conv_gemm_kernel(x_ref, w_ref, y_ref, stats_ref, acc_ref):
    i = pl.program_id(0)
    k = pl.program_id(1)
    nk = pl.num_programs(1)

    @pl.when((i == 0) & (k == 0))
    def _():
        stats_ref[...] = jnp.zeros_like(stats_ref)

    @pl.when(k == 0)
    def _():
        acc_ref[...] = jnp.zeros_like(acc_ref)

    acc_ref[...] += jnp.dot(x_ref[...], w_ref[...],
                            preferred_element_type=jnp.float32)

    @pl.when(k == nk - 1)
    def _():
        y = acc_ref[...]
        y_ref[...] = y.astype(y_ref.dtype)
        tm, cp = y.shape
        y3 = y.reshape(tm // 8, 8, cp)            # sublane-preserving split
        stats_ref[0:8, :] += jnp.sum(y3, axis=0)          # dense 8-row store
        stats_ref[8:16, :] += jnp.sum(y3 * y3, axis=0)    # dense 8-row store


def conv_gemm(x, w, out_dtype=jnp.float32):
    """x: (M, K), w: (K, C)  ->  (Mp, Cp) out_dtype (zero-padded), (16, Cp) f32 stats.

    Inputs are cast to bf16 (native MXU dtype); accumulation is f32.
    Bias-free on purpose: conv1/conv2 biases cancel in training-mode BN and the
    shortcut bias is folded into the bn2 shift.
    """
    M, K = x.shape
    K2, C = w.shape
    assert K == K2
    Mp = _round_up(M, TM_EW)          # multiple of 512 so bn_act tiles evenly
    Cp = _round_up(C, 128)
    if K <= TK_MAX:
        Kp = _round_up(K, 128)
        tk = Kp
    else:
        Kp = _round_up(K, TK_MAX)
        tk = TK_MAX

    xp = _pad2(x.astype(jnp.bfloat16), Mp, Kp)
    wp = _pad2(w.astype(jnp.bfloat16), Kp, Cp)

    y, stats = pl.pallas_call(
        _conv_gemm_kernel,
        out_shape=(jax.ShapeDtypeStruct((Mp, Cp), out_dtype),
                   jax.ShapeDtypeStruct((16, Cp), jnp.float32)),
        grid=(Mp // TM_MM, Kp // tk),
        in_specs=[
            pl.BlockSpec((TM_MM, tk), lambda i, k: (i, k)),
            pl.BlockSpec((tk, Cp), lambda i, k: (k, 0)),
        ],
        out_specs=(
            pl.BlockSpec((TM_MM, Cp), lambda i, k: (i, 0)),
            pl.BlockSpec((16, Cp), lambda i, k: (0, 0)),
        ),
        scratch_shapes=[pltpu.VMEM((TM_MM, Cp), jnp.float32)],
        # both axes "arbitrary": the stats output accumulates across the M axis
        compiler_params=pltpu.CompilerParams(
            dimension_semantics=("arbitrary", "arbitrary")),
    )(xp, wp)
    return y, stats


# ----------------------------------------------------------------------------
# Kernel 2: fused BN affine (+ optional residual add) (+ optional ReLU),
#           512-row tiles, configurable output dtype (bf16 activations).
# ----------------------------------------------------------------------------
def _make_bn_act_kernel(add_residual, do_relu):
    def _finish(v, o_ref):
        if do_relu:
            v = jnp.maximum(v, 0.0)
        o_ref[...] = v.astype(o_ref.dtype)

    if add_residual:
        def kernel(y_ref, sc_ref, sh_ref, r_ref, o_ref):
            _finish(y_ref[...] * sc_ref[...] + sh_ref[...] + r_ref[...], o_ref)
    else:
        def kernel(y_ref, sc_ref, sh_ref, o_ref):
            _finish(y_ref[...] * sc_ref[...] + sh_ref[...], o_ref)
    return kernel


def bn_act(y, scale, shift, residual=None, relu=True, out_dtype=jnp.float32):
    """y: (Mp, Cp) f32 (padded); scale/shift: (Cp,); residual: (Mp, Cp) f32."""
    Mp, Cp = y.shape
    assert Mp % TM_EW == 0
    tm = TM_EW

    args = [y, scale.reshape(1, Cp), shift.reshape(1, Cp)]
    in_specs = [
        pl.BlockSpec((tm, Cp), lambda i: (i, 0)),
        pl.BlockSpec((1, Cp), lambda i: (0, 0)),
        pl.BlockSpec((1, Cp), lambda i: (0, 0)),
    ]
    if residual is not None:
        args.append(residual)
        in_specs.append(pl.BlockSpec((tm, Cp), lambda i: (i, 0)))

    return pl.pallas_call(
        _make_bn_act_kernel(residual is not None, relu),
        out_shape=jax.ShapeDtypeStruct((Mp, Cp), out_dtype),
        grid=(Mp // tm,),
        in_specs=in_specs,
        out_specs=pl.BlockSpec((tm, Cp), lambda i: (i, 0)),
        compiler_params=pltpu.CompilerParams(dimension_semantics=("parallel",)),
    )(*args)


# ----------------------------------------------------------------------------
# Tiny JAX glue
# ----------------------------------------------------------------------------
def _im2col3x3(x_nhwc, stride):
    """3x3 / pad=1 patch extraction.  Pure data rearrangement (XLA glue)."""
    N, H, W, C = x_nhwc.shape
    xp = jnp.pad(x_nhwc, ((0, 0), (1, 1), (1, 1), (0, 0)))
    Ho = (H + 2 - 3) // stride + 1
    Wo = (W + 2 - 3) // stride + 1
    cols = []
    for di in range(3):
        for dj in range(3):
            cols.append(
                xp[:, di: di + (Ho - 1) * stride + 1: stride,
                      dj: dj + (Wo - 1) * stride + 1: stride, :])
    patches = jnp.concatenate(cols, axis=-1)   # k = (di*3+dj)*C + c
    return patches.reshape(N * Ho * Wo, 9 * C), Ho, Wo


def _bn_scale_shift(stats, m_rows, gamma, beta, eps):
    """Fold fused (16, Cp) stats into per-channel BN scale/shift (padded)."""
    Cp = stats.shape[1]
    C = gamma.shape[0]
    s = jnp.sum(stats[0:8], axis=0)
    ss = jnp.sum(stats[8:16], axis=0)
    mean = s / m_rows
    # NOTE: E[y^2]-E[y]^2 in f32; fine at this tolerance / magnitude.
    var = ss / m_rows - mean * mean
    g = jnp.pad(gamma, (0, Cp - C))
    b = jnp.pad(beta, (0, Cp - C))
    scale = g * lax.rsqrt(var + eps)           # zero on padded channels
    shift = b - mean * scale
    return scale, shift


# ----------------------------------------------------------------------------
# Residual module (matches torch.nn defaults: BN training-mode batch stats,
# eps=1e-5, gamma=1, beta=0; conv weights/bias ~ U(-1/sqrt(fan_in), 1/sqrt(fan_in)))
# ----------------------------------------------------------------------------
class Residual:
    def __init__(self, input_size, num_output, strides=1, use_1conv=False, *, key):
        def conv_init(k, cout, cin, kh, kw):
            fan_in = cin * kh * kw
            bound = 1.0 / float(fan_in) ** 0.5
            kw_, kb_ = jax.random.split(k)
            w = jax.random.uniform(kw_, (cout, cin, kh, kw), jnp.float32, -bound, bound)
            b = jax.random.uniform(kb_, (cout,), jnp.float32, -bound, bound)
            return w, b

        k1, k2, k3 = jax.random.split(key, 3)
        self.strides = strides
        self.use_1conv = use_1conv
        # b1/b2 are kept for the reference; the Pallas path omits them because a
        # bias before training-mode BatchNorm cancels exactly in normalization.
        self.w1, self.b1 = conv_init(k1, num_output, input_size, 3, 3)
        self.w2, self.b2 = conv_init(k2, num_output, num_output, 3, 3)
        if use_1conv:
            self.w3, self.b3 = conv_init(k3, num_output, input_size, 1, 1)
        self.gamma1 = jnp.ones((num_output,), jnp.float32)
        self.beta1 = jnp.zeros((num_output,), jnp.float32)
        self.gamma2 = jnp.ones((num_output,), jnp.float32)
        self.beta2 = jnp.zeros((num_output,), jnp.float32)
        self.eps = 1e-5

    def __call__(self, x_nchw):
        x = jnp.transpose(x_nchw, (0, 2, 3, 1)).astype(jnp.float32)  # NCHW -> NHWC
        N, H, W, Cin = x.shape
        Cout = self.w1.shape[0]
        s = self.strides
        if not self.use_1conv:
            assert s == 1 and Cin == Cout, \
                "identity shortcut requires stride == 1 and Cin == Cout"

        # ---- conv1 (3x3, pad 1, stride s) as bf16 im2col GEMM + fused stats
        p1, Ho, Wo = _im2col3x3(x.astype(jnp.bfloat16), s)
        wf1 = jnp.transpose(self.w1, (2, 3, 1, 0)).reshape(9 * Cin, Cout)
        M1 = N * Ho * Wo
        y1, stats1 = conv_gemm(p1, wf1)                      # (Mp, Cp) f32

        # ---- bn1 + ReLU (bf16 activation output keeps downstream traffic light)
        scale1, shift1 = _bn_scale_shift(stats1, M1, self.gamma1, self.beta1, self.eps)
        a1 = bn_act(y1, scale1, shift1, relu=True, out_dtype=jnp.bfloat16)

        # ---- conv2 (3x3, pad 1, stride 1)
        a1s = a1[:M1, :Cout].reshape(N, Ho, Wo, Cout)        # drop pad rows/chans
        p2, _, _ = _im2col3x3(a1s, 1)                        # bf16 patches
        wf2 = jnp.transpose(self.w2, (2, 3, 1, 0)).reshape(9 * Cout, Cout)
        y2, stats2 = conv_gemm(p2, wf2)
        Mp, Cp = y2.shape

        # ---- shortcut
        if self.use_1conv:
            xs = x[:, ::s, ::s, :].reshape(M1, Cin).astype(jnp.bfloat16)
            wf3 = jnp.transpose(self.w3, (2, 3, 1, 0)).reshape(Cin, Cout)
            res, _ = conv_gemm(xs, wf3)                      # bias folded below
            extra_shift = jnp.pad(self.b3, (0, Cp - Cout))
        else:
            res = _pad2(x.reshape(M1, Cin), Mp, Cp)
            extra_shift = None

        # ---- bn2 + residual add + ReLU (single fused Pallas pass)
        scale2, shift2 = _bn_scale_shift(stats2, M1, self.gamma2, self.beta2, self.eps)
        if extra_shift is not None:
            shift2 = shift2 + extra_shift                    # fold conv3 bias
        out = bn_act(y2, scale2, shift2, residual=res, relu=True,
                     out_dtype=jnp.float32)

        out = out[:M1, :Cout].reshape(N, Ho, Wo, Cout)
        return jnp.transpose(out, (0, 3, 1, 2))              # NHWC -> NCHW


# ----------------------------------------------------------------------------
# Pure-JAX references for verification.
#   bf16_matmul=True  : conv operands quantized to bf16, f32 accumulation
#                       (matches the Pallas path's MXU dtype -> tight check)
#   bf16_matmul=False : full f32 HIGHEST-precision reference (loose sanity check)
# ----------------------------------------------------------------------------
def residual_reference(m, x, *, bf16_matmul=False):
    if bf16_matmul:
        cast = lambda a: a.astype(jnp.bfloat16)
        prec = None
    else:
        cast = lambda a: a
        prec = lax.Precision.HIGHEST

    def conv(x, w, b, stride, pad):
        y = lax.conv_general_dilated(
            cast(x), cast(w), window_strides=(stride, stride),
            padding=[(pad, pad), (pad, pad)],
            dimension_numbers=("NCHW", "OIHW", "NCHW"),
            preferred_element_type=jnp.float32, precision=prec)
        return y + b.reshape(1, -1, 1, 1)

    def bn(y, gamma, beta):
        mu = jnp.mean(y, axis=(0, 2, 3), keepdims=True)
        var = jnp.mean((y - mu) ** 2, axis=(0, 2, 3), keepdims=True)
        return (y - mu) * lax.rsqrt(var + m.eps) * gamma.reshape(1, -1, 1, 1) \
               + beta.reshape(1, -1, 1, 1)

    y = jnp.maximum(bn(conv(x, m.w1, m.b1, m.strides, 1), m.gamma1, m.beta1), 0.0)
    y = bn(conv(y, m.w2, m.b2, 1, 1), m.gamma2, m.beta2)
    sc = conv(x, m.w3, m.b3, m.strides, 0) if m.use_1conv else x
    return jnp.maximum(y + sc, 0.0)


if __name__ == "__main__":
    key = jax.random.PRNGKey(0)
    k_in, k_mod1, k_mod2 = jax.random.split(key, 3)

    N, C, H, W = 2, 8, 16, 16
    x = jax.random.uniform(k_in, (N, C, H, W), jnp.float32)

    # Case 1: identity shortcut (stride 1, Cin == Cout)
    block1 = Residual(C, C, strides=1, use_1conv=False, key=k_mod1)
    out1 = jax.block_until_ready(jax.jit(lambda a: block1(a))(x))
    ref1_m = residual_reference(block1, x, bf16_matmul=True)
    ref1_f = residual_reference(block1, x, bf16_matmul=False)
    assert out1.shape == (N, C, H, W)
    assert jnp.allclose(out1, ref1_m, atol=5e-3, rtol=5e-3), \
        float(jnp.max(jnp.abs(out1 - ref1_m)))
    assert float(jnp.max(jnp.abs(out1 - ref1_f))) < 5e-2   # bf16 MXU quantization bound

    # Case 2: projection shortcut (stride 2, Cin != Cout, 1x1 conv with bias)
    C2 = 16
    block2 = Residual(C, C2, strides=2, use_1conv=True, key=k_mod2)
    out2 = jax.block_until_ready(jax.jit(lambda a: block2(a))(x))
    ref2_m = residual_reference(block2, x, bf16_matmul=True)
    ref2_f = residual_reference(block2, x, bf16_matmul=False)
    assert out2.shape == (N, C2, H // 2, W // 2)
    assert jnp.allclose(out2, ref2_m, atol=5e-3, rtol=5e-3), \
        float(jnp.max(jnp.abs(out2 - ref2_m)))
    assert float(jnp.max(jnp.abs(out2 - ref2_f))) < 5e-2

    print("KERNEL_OK")
</pallas_src>

<mosaic_0001>
module attributes {stable_mosaic.version = 11 : i64} {
  func.func @_conv_gemm_kernel(%arg0: i32, %arg1: i32, %arg2: memref<256x128xbf16, #tpu.memory_space<vmem>>, %arg3: memref<128x128xbf16, #tpu.memory_space<vmem>>, %arg4: memref<256x128xf32, #tpu.memory_space<vmem>>, %arg5: memref<16x128xf32, #tpu.memory_space<vmem>>, %arg6: memref<256x128xf32, #tpu.memory_space<vmem>>) attributes {dimension_semantics = [#tpu.dimension_semantics<arbitrary>, #tpu.dimension_semantics<arbitrary>], iteration_bounds = array<i64: 2, 1>, scalar_prefetch = 0 : i64, scratch_operands = 1 : i64, tpu.core_type = #tpu.core_type<tc>, window_params = [{transform_indices = @transform_0, window_bounds = array<i64: 256, 128>}, {transform_indices = @transform_1, window_bounds = array<i64: 128, 128>}, {transform_indices = @transform_2, window_bounds = array<i64: 256, 128>}, {pipeline_mode = #tpu.pipeline_mode<synchronous>, transform_indices = @transform_3, window_bounds = array<i64: 16, 128>}]} {
    %c0_i32 = arith.constant 0 : i32
    %0 = arith.cmpi eq, %arg0, %c0_i32 : i32
    %c0_i32_0 = arith.constant 0 : i32
    %1 = arith.cmpi eq, %arg1, %c0_i32_0 : i32
    %2 = arith.andi %0, %1 : i1
    %3 = arith.extui %2 : i1 to i32
    %c0_i32_1 = arith.constant 0 : i32
    %4 = arith.cmpi ne, %3, %c0_i32_1 : i32
    scf.if %4 {
      %cst_13 = arith.constant 0.000000e+00 : f32
      %17 = vector.broadcast %cst_13 : f32 to vector<16x128xf32>
      %c0_14 = arith.constant 0 : index
      %c0_15 = arith.constant 0 : index
      %18 = vector.load %arg5[%c0_14, %c0_15] : memref<16x128xf32, #tpu.memory_space<vmem>>, vector<16x128xf32>
      tpu.vector_store %arg5[%c0_14, %c0_15], %17 {strides = array<i32>} : memref<16x128xf32, #tpu.memory_space<vmem>>, vector<16x128xf32>,
    } else {
    }
    %c0_i32_2 = arith.constant 0 : i32
    %5 = arith.cmpi eq, %arg1, %c0_i32_2 : i32
    %6 = arith.extui %5 : i1 to i32
    %c0_i32_3 = arith.constant 0 : i32
    %7 = arith.cmpi ne, %6, %c0_i32_3 : i32
    scf.if %7 {
      %cst_13 = arith.constant 0.000000e+00 : f32
      %17 = vector.broadcast %cst_13 : f32 to vector<256x128xf32>
      %c0_14 = arith.constant 0 : index
      %c0_15 = arith.constant 0 : index
      %18 = vector.load %arg6[%c0_14, %c0_15] : memref<256x128xf32, #tpu.memory_space<vmem>>, vector<256x128xf32>
      tpu.vector_store %arg6[%c0_14, %c0_15], %17 {strides = array<i32>} : memref<256x128xf32, #tpu.memory_space<vmem>>, vector<256x128xf32>,
    } else {
    }
    %c0 = arith.constant 0 : index
    %c0_4 = arith.constant 0 : index
    %8 = vector.load %arg6[%c0, %c0_4] : memref<256x128xf32, #tpu.memory_space<vmem>>, vector<256x128xf32>
    %c0_5 = arith.constant 0 : index
    %c0_6 = arith.constant 0 : index
    %9 = vector.load %arg2[%c0_5, %c0_6] : memref<256x128xbf16, #tpu.memory_space<vmem>>, vector<256x128xbf16>
    %c0_7 = arith.constant 0 : index
    %c0_8 = arith.constant 0 : index
    %10 = vector.load %arg3[%c0_7, %c0_8] : memref<128x128xbf16, #tpu.memory_space<vmem>>, vector<128x128xbf16>
    %cst = arith.constant dense<0.000000e+00> : vector<256x128xf32>
    %11 = tpu.matmul %9, %10, %cst {dimension_numbers = #tpu.dot_dimension_numbers<[1], [0], [0], [1], [0, 0, 1, 1], [], []>} : vector<256x128xbf16>, vector<128x128xbf16>, vector<256x128xf32> -> vector<256x128xf32>
    %12 = arith.addf %8, %11 : vector<256x128xf32>
    %c0_9 = arith.constant 0 : index
    %c0_10 = arith.constant 0 : index
    %13 = vector.load %arg6[%c0_9, %c0_10] : memref<256x128xf32, #tpu.memory_space<vmem>>, vector<256x128xf32>
    tpu.vector_store %arg6[%c0_9, %c0_10], %12 {strides = array<i32>} : memref<256x128xf32, #tpu.memory_space<vmem>>, vector<256x128xf32>,
    %c0_i32_11 = arith.constant 0 : i32
    %14 = arith.cmpi eq, %arg1, %c0_i32_11 : i32
    %15 = arith.extui %14 : i1 to i32
    %c0_i32_12 = arith.constant 0 : i32
    %16 = arith.cmpi ne, %15, %c0_i32_12 : i32
    scf.if %16 {
      %c0_13 = arith.constant 0 : index
      %c0_14 = arith.constant 0 : index
      %17 = vector.load %arg6[%c0_13, %c0_14] : memref<256x128xf32, #tpu.memory_space<vmem>>, vector<256x128xf32>
      %c0_15 = arith.constant 0 : index
      %c0_16 = arith.constant 0 : index
      %18 = vector.load %arg4[%c0_15, %c0_16] : memref<256x128xf32, #tpu.memory_space<vmem>>, vector<256x128xf32>
      tpu.vector_store %arg4[%c0_15, %c0_16], %17 {strides = array<i32>} : memref<256x128xf32, #tpu.memory_space<vmem>>, vector<256x128xf32>,
      %19 = vector.shape_cast %17 : vector<256x128xf32> to vector<32x8x128xf32>
      %c0_17 = arith.constant 0 : index
      %c0_18 = arith.constant 0 : index
      %20 = vector.load %arg5[%c0_17, %c0_18] : memref<16x128xf32, #tpu.memory_space<vmem>>, vector<8x128xf32>
      %cst_19 = arith.constant dense<0.000000e+00> : vector<8x128xf32>
      %21 = vector.multi_reduction <add>, %19, %cst_19 [0] : vector<32x8x128xf32> to vector<8x128xf32>
      %22 = arith.addf %20, %21 : vector<8x128xf32>
      %c0_20 = arith.constant 0 : index
      %c0_21 = arith.constant 0 : index
      %23 = vector.load %arg5[%c0_20, %c0_21] : memref<16x128xf32, #tpu.memory_space<vmem>>, vector<8x128xf32>
      tpu.vector_store %arg5[%c0_20, %c0_21], %22 {strides = array<i32>} : memref<16x128xf32, #tpu.memory_space<vmem>>, vector<8x128xf32>,
      %c8 = arith.constant 8 : index
      %c0_22 = arith.constant 0 : index
      %24 = vector.load %arg5[%c8, %c0_22] : memref<16x128xf32, #tpu.memory_space<vmem>>, vector<8x128xf32>
      %25 = arith.mulf %19, %19 : vector<32x8x128xf32>
      %cst_23 = arith.constant dense<0.000000e+00> : vector<8x128xf32>
      %26 = vector.multi_reduction <add>, %25, %cst_23 [0] : vector<32x8x128xf32> to vector<8x128xf32>
      %27 = arith.addf %24, %26 : vector<8x128xf32>
      %c8_24 = arith.constant 8 : index
      %c0_25 = arith.constant 0 : index
      %28 = vector.load %arg5[%c8_24, %c0_25] : memref<16x128xf32, #tpu.memory_space<vmem>>, vector<8x128xf32>
      tpu.vector_store %arg5[%c8_24, %c0_25], %27 {strides = array<i32>} : memref<16x128xf32, #tpu.memory_space<vmem>>, vector<8x128xf32>,
    } else {
    }
    return
  }
  func.func @transform_0(%arg0: i32, %arg1: i32) -> (i32, i32) {
    %c0_i32 = arith.constant 0 : i32
    return %arg0, %arg1 : i32, i32
  }
  func.func @transform_1(%arg0: i32, %arg1: i32) -> (i32, i32) {
    %c0_i32 = arith.constant 0 : i32
    %c0_i32_0 = arith.constant 0 : i32
    return %arg1, %c0_i32 : i32, i32
  }
  func.func @transform_2(%arg0: i32, %arg1: i32) -> (i32, i32) {
    %c0_i32 = arith.constant 0 : i32
    %c0_i32_0 = arith.constant 0 : i32
    return %arg0, %c0_i32 : i32, i32
  }
  func.func @transform_3(%arg0: i32, %arg1: i32) -> (i32, i32) {
    %c0_i32 = arith.constant 0 : i32
    %c0_i32_0 = arith.constant 0 : i32
    %c0_i32_1 = arith.constant 0 : i32
    return %c0_i32, %c0_i32_0 : i32, i32
  }
}

module attributes {stable_mosaic.version = 11 : i64} {
  func.func @kernel(%arg0: i32, %arg1: memref<512x128xf32, #tpu.memory_space<vmem>>, %arg2: memref<1x128xf32, #tpu.memory_space<vmem>>, %arg3: memref<1x128xf32, #tpu.memory_space<vmem>>, %arg4: memref<512x128xbf16, #tpu.memory_space<vmem>>) attributes {dimension_semantics = [#tpu.dimension_semantics<parallel>], iteration_bounds = array<i64: 1>, scalar_prefetch = 0 : i64, scratch_operands = 0 : i64, tpu.core_type = #tpu.core_type<tc>, window_params = [{transform_indices = @transform_0, window_bounds = array<i64: 512, 128>}, {pipeline_mode = #tpu.pipeline_mode<synchronous>, transform_indices = @transform_1, window_bounds = array<i64: 1, 128>}, {pipeline_mode = #tpu.pipeline_mode<synchronous>, transform_indices = @transform_2, window_bounds = array<i64: 1, 128>}, {transform_indices = @transform_3, window_bounds = array<i64: 512, 128>}]} {
    %c0 = arith.constant 0 : index
    %c0_0 = arith.constant 0 : index
    %0 = vector.load %arg1[%c0, %c0_0] : memref<512x128xf32, #tpu.memory_space<vmem>>, vector<512x128xf32>
    %c0_1 = arith.constant 0 : index
    %c0_2 = arith.constant 0 : index
    %1 = vector.load %arg2[%c0_1, %c0_2] : memref<1x128xf32, #tpu.memory_space<vmem>>, vector<1x128xf32>
    %2 = vector.broadcast %1 : vector<1x128xf32> to vector<512x128xf32>
    %3 = arith.mulf %0, %2 : vector<512x128xf32>
    %c0_3 = arith.constant 0 : index
    %c0_4 = arith.constant 0 : index
    %4 = vector.load %arg3[%c0_3, %c0_4] : memref<1x128xf32, #tpu.memory_space<vmem>>, vector<1x128xf32>
    %5 = vector.broadcast %4 : vector<1x128xf32> to vector<512x128xf32>
    %6 = arith.addf %3, %5 : vector<512x128xf32>
    %cst = arith.constant 0.000000e+00 : f32
    %7 = vector.broadcast %cst : f32 to vector<512x128xf32>
    %8 = arith.maximumf %6, %7 : vector<512x128xf32>
    %9 = arith.truncf %8 : vector<512x128xf32> to vector<512x128xbf16>
    %c0_5 = arith.constant 0 : index
    %c0_6 = arith.constant 0 : index
    %10 = vector.load %arg4[%c0_5, %c0_6] : memref<512x128xbf16, #tpu.memory_space<vmem>>, vector<512x128xbf16>
    tpu.vector_store %arg4[%c0_5, %c0_6], %9 {strides = array<i32>} : memref<512x128xbf16, #tpu.memory_space<vmem>>, vector<512x128xbf16>,
    return
  }
  func.func @transform_0(%arg0: i32) -> (i32, i32) {
    %c0_i32 = arith.constant 0 : i32
    %c0_i32_0 = arith.constant 0 : i32
    return %arg0, %c0_i32 : i32, i32
  }
  func.func @transform_1(%arg0: i32) -> (i32, i32) {
    %c0_i32 = arith.constant 0 : i32
    %c0_i32_0 = arith.constant 0 : i32
    %c0_i32_1 = arith.constant 0 : i32
    return %c0_i32, %c0_i32_0 : i32, i32
  }
  func.func @transform_2(%arg0: i32) -> (i32, i32) {
    %c0_i32 = arith.constant 0 : i32
    %c0_i32_0 = arith.constant 0 : i32
    %c0_i32_1 = arith.constant 0 : i32
    return %c0_i32, %c0_i32_0 : i32, i32
  }
  func.func @transform_3(%arg0: i32) -> (i32, i32) {
    %c0_i32 = arith.constant 0 : i32
    %c0_i32_0 = arith.constant 0 : i32
    return %arg0, %c0_i32 : i32, i32
  }
}

module attributes {stable_mosaic.version = 11 : i64} {
  func.func @kernel(%arg0: i32, %arg1: memref<512x128xf32, #tpu.memory_space<vmem>>, %arg2: memref<1x128xf32, #tpu.memory_space<vmem>>, %arg3: memref<1x128xf32, #tpu.memory_space<vmem>>, %arg4: memref<512x128xf32, #tpu.memory_space<vmem>>, %arg5: memref<512x128xf32, #tpu.memory_space<vmem>>) attributes {dimension_semantics = [#tpu.dimension_semantics<parallel>], iteration_bounds = array<i64: 1>, scalar_prefetch = 0 : i64, scratch_operands = 0 : i64, tpu.core_type = #tpu.core_type<tc>, window_params = [{transform_indices = @transform_0, window_bounds = array<i64: 512, 128>}, {pipeline_mode = #tpu.pipeline_mode<synchronous>, transform_indices = @transform_1, window_bounds = array<i64: 1, 128>}, {pipeline_mode = #tpu.pipeline_mode<synchronous>, transform_indices = @transform_2, window_bounds = array<i64: 1, 128>}, {transform_indices = @transform_3, window_bounds = array<i64: 512, 128>}, {transform_indices = @transform_4, window_bounds = array<i64: 512, 128>}]} {
    %c0 = arith.constant 0 : index
    %c0_0 = arith.constant 0 : index
    %0 = vector.load %arg1[%c0, %c0_0] : memref<512x128xf32, #tpu.memory_space<vmem>>, vector<512x128xf32>
    %c0_1 = arith.constant 0 : index
    %c0_2 = arith.constant 0 : index
    %1 = vector.load %arg2[%c0_1, %c0_2] : memref<1x128xf32, #tpu.memory_space<vmem>>, vector<1x128xf32>
    %2 = vector.broadcast %1 : vector<1x128xf32> to vector<512x128xf32>
    %3 = arith.mulf %0, %2 : vector<512x128xf32>
    %c0_3 = arith.constant 0 : index
    %c0_4 = arith.constant 0 : index
    %4 = vector.load %arg3[%c0_3, %c0_4] : memref<1x128xf32, #tpu.memory_space<vmem>>, vector<1x128xf32>
    %5 = vector.broadcast %4 : vector<1x128xf32> to vector<512x128xf32>
    %6 = arith.addf %3, %5 : vector<512x128xf32>
    %c0_5 = arith.constant 0 : index
    %c0_6 = arith.constant 0 : index
    %7 = vector.load %arg4[%c0_5, %c0_6] : memref<512x128xf32, #tpu.memory_space<vmem>>, vector<512x128xf32>
    %8 = arith.addf %6, %7 : vector<512x128xf32>
    %cst = arith.constant 0.000000e+00 : f32
    %9 = vector.broadcast %cst : f32 to vector<512x128xf32>
    %10 = arith.maximumf %8, %9 : vector<512x128xf32>
    %c0_7 = arith.constant 0 : index
    %c0_8 = arith.constant 0 : index
    %11 = vector.load %arg5[%c0_7, %c0_8] : memref<512x128xf32, #tpu.memory_space<vmem>>, vector<512x128xf32>
    tpu.vector_store %arg5[%c0_7, %c0_8], %10 {strides = array<i32>} : memref<512x128xf32, #tpu.memory_space<vmem>>, vector<512x128xf32>,
    return
  }
  func.func @transform_0(%arg0: i32) -> (i32, i32) {
    %c0_i32 = arith.constant 0 : i32
    %c0_i32_0 = arith.constant 0 : i32
    return %arg0, %c0_i32 : i32, i32
  }
  func.func @transform_1(%arg0: i32) -> (i32, i32) {
    %c0_i32 = arith.constant 0 : i32
    %c0_i32_0 = arith.constant 0 : i32
    %c0_i32_1 = arith.constant 0 : i32
    return %c0_i32, %c0_i32_0 : i32, i32
  }
  func.func @transform_2(%arg0: i32) -> (i32, i32) {
    %c0_i32 = arith.constant 0 : i32
    %c0_i32_0 = arith.constant 0 : i32
    %c0_i32_1 = arith.constant 0 : i32
    return %c0_i32, %c0_i32_0 : i32, i32
  }
  func.func @transform_3(%arg0: i32) -> (i32, i32) {
    %c0_i32 = arith.constant 0 : i32
    %c0_i32_0 = arith.constant 0 : i32
    return %arg0, %c0_i32 : i32, i32
  }
  func.func @transform_4(%arg0: i32) -> (i32, i32) {
    %c0_i32 = arith.constant 0 : i32
    %c0_i32_0 = arith.constant 0 : i32
    return %arg0, %c0_i32 : i32, i32
  }
}

</mosaic_0001>

<llo_original>
// kernel: _lambda_.5
$region0: #{_lambda_.5}
  #allocation0 [shape = 'u32[]', space=smem, size = 0x4, offset = 0x4, fixed_abs, tag = 'smem constant byte address 0x4 - core index']
  #allocation1 [shape = 'u32[72,128]{1,0:T(1,128)}', space=vmem, size = 0x9000, scoped, tag = 'internal scratch']
  %s0 = inlined_call_operand.vmem [shape: f32[512,128], index: 0, kind: input, shape index: {}]
  %s1 = inlined_call_operand.vmem [shape: f32[1,128], index: 1, kind: input, shape index: {}]
  %s2 = inlined_call_operand.vmem [shape: f32[1,128], index: 2, kind: input, shape index: {}]
  %s3 = inlined_call_operand.vmem [shape: bf16[512,128], index: 3, kind: output, shape index: {}]
  %s4 = sld [smem:[#allocation0]]
  $region22: #{_lambda_.5} parent=0
    _
  %s6 = ssub.s32 1, %s4
  %s7 = scalar_select 0, %s6, %s4
  // Predicated region
  $region2: #{_lambda_.5} parent=0 // pred_check
    _
  $region3: #{_lambda_.5} parent=0 // pred_check_branch
    %9 = sbr.rel (0) target = $region5
  $region4: #{_lambda_.5} parent=0 // pred_region
    _
  $region5: #{_lambda_.5} parent=0 // pred_fallthru
    _
  // Predicated region
  $region6: #{_lambda_.5} parent=0 // pred_check
    _
  $region7: #{_lambda_.5} parent=0 // pred_check_branch
    %11 = sbr.rel (0) target = $region9
  $region8: #{_lambda_.5} parent=0 // pred_region
    _
  $region9: #{_lambda_.5} parent=0 // pred_fallthru
    _
  // Predicated region
  $region10: #{_lambda_.5} parent=0 // pred_check
    _
  $region11: #{_lambda_.5} parent=0 // pred_check_branch
    %13 = sbr.rel (0) target = $region13
  $region12: #{_lambda_.5} parent=0 // pred_region
    _
  $region13: #{_lambda_.5} parent=0 // pred_fallthru
    _
  %v14 = vld [vmem:[%s0] sm:$0xff]
  %v15 = vld [vmem:[%s0 + $0x8] sm:$0xff]
  %v16 = vld [vmem:[%s0 + $0x10] sm:$0xff]
  %v17 = vld [vmem:[%s0 + $0x18] sm:$0xff]
  %v18 = vld [vmem:[%s0 + $0x20] sm:$0xff]
  %v19 = vld [vmem:[%s0 + $0x28] sm:$0xff]
  %v20 = vld [vmem:[%s0 + $0x30] sm:$0xff]
  %v21 = vld [vmem:[%s0 + $0x38] sm:$0xff]
  %v22 = vld [vmem:[%s0 + $0x40] sm:$0xff]
  %v23 = vld [vmem:[%s0 + $0x48] sm:$0xff]
  %v24 = vld [vmem:[%s0 + $0x50] sm:$0xff]
  %v25 = vld [vmem:[%s0 + $0x58] sm:$0xff]
  %v26 = vld [vmem:[%s0 + $0x60] sm:$0xff]
  %v27 = vld [vmem:[%s0 + $0x68] sm:$0xff]
  %v28 = vld [vmem:[%s0 + $0x70] sm:$0xff]
  %v29 = vld [vmem:[%s0 + $0x78] sm:$0xff]
  %v30 = vld [vmem:[%s0 + $0x80] sm:$0xff]
  %v31 = vld [vmem:[%s0 + $0x88] sm:$0xff]
  %v32 = vld [vmem:[%s0 + $0x90] sm:$0xff]
  %v33 = vld [vmem:[%s0 + $0x98] sm:$0xff]
  %v34 = vld [vmem:[%s0 + $0xa0] sm:$0xff]
  %v35 = vld [vmem:[%s0 + $0xa8] sm:$0xff]
  %v36 = vld [vmem:[%s0 + $0xb0] sm:$0xff]
  %v37 = vld [vmem:[%s0 + $0xb8] sm:$0xff]
  %v38 = vld [vmem:[%s0 + $0xc0] sm:$0xff]
  %v39 = vld [vmem:[%s0 + $0xc8] sm:$0xff]
  %v40 = vld [vmem:[%s0 + $0xd0] sm:$0xff]
  %v41 = vld [vmem:[%s0 + $0xd8] sm:$0xff]
  %v42 = vld [vmem:[%s0 + $0xe0] sm:$0xff]
  %v43 = vld [vmem:[%s0 + $0xe8] sm:$0xff]
  %v44 = vld [vmem:[%s0 + $0xf0] sm:$0xff]
  %v45 = vld [vmem:[%s0 + $0xf8] sm:$0xff]
  %v46 = vld [vmem:[%s0 + $0x100] sm:$0xff]
  %v47 = vld [vmem:[%s0 + $0x108] sm:$0xff]
  %v48 = vld [vmem:[%s0 + $0x110] sm:$0xff]
  %v49 = vld [vmem:[%s0 + $0x118] sm:$0xff]
  %v50 = vld [vmem:[%s0 + $0x120] sm:$0xff]
  %v51 = vld [vmem:[%s0 + $0x128] sm:$0xff]
  %v52 = vld [vmem:[%s0 + $0x130] sm:$0xff]
  %v53 = vld [vmem:[%s0 + $0x138] sm:$0xff]
  %v54 = vld [vmem:[%s0 + $0x140] sm:$0xff]
  %v55 = vld [vmem:[%s0 + $0x148] sm:$0xff]
  %v56 = vld [vmem:[%s0 + $0x150] sm:$0xff]
  %v57 = vld [vmem:[%s0 + $0x158] sm:$0xff]
  %v58 = vld [vmem:[%s0 + $0x160] sm:$0xff]
  %v59 = vld [vmem:[%s0 + $0x168] sm:$0xff]
  %v60 = vld [vmem:[%s0 + $0x170] sm:$0xff]
  %v61 = vld [vmem:[%s0 + $0x178] sm:$0xff]
  %v62 = vld [vmem:[%s0 + $0x180] sm:$0xff]
  %v63 = vld [vmem:[%s0 + $0x188] sm:$0xff]
  %v64 = vld [vmem:[%s0 + $0x190] sm:$0xff]
  %v65 = vld [vmem:[%s0 + $0x198] sm:$0xff]
  %v66 = vld [vmem:[%s0 + $0x1a0] sm:$0xff]
  %v67 = vld [vmem:[%s0 + $0x1a8] sm:$0xff]
  %v68 = vld [vmem:[%s0 + $0x1b0] sm:$0xff]
  %v69 = vld [vmem:[%s0 + $0x1b8] sm:$0xff]
  %v70 = vld [vmem:[%s0 + $0x1c0] sm:$0xff]
  %v71 = vld [vmem:[%s0 + $0x1c8] sm:$0xff]
  %v72 = vld [vmem:[%s0 + $0x1d0] sm:$0xff]
  %v73 = vld [vmem:[%s0 + $0x1d8] sm:$0xff]
  %v74 = vld [vmem:[%s0 + $0x1e0] sm:$0xff]
  %v75 = vld [vmem:[%s0 + $0x1e8] sm:$0xff]
  %v76 = vld [vmem:[%s0 + $0x1f0] sm:$0xff]
  %v77 = vld [vmem:[%s0 + $0x1f8] sm:$0xff]
  %v78 = vld [vmem:[%s1] sm:$0x1]
  %v80 = vperm.slane %v78, 0
  %v82 = vmul.f32 %v14, %v80
  %v83 = vmul.f32 %v15, %v80
  %v84 = vmul.f32 %v16, %v80
  %v85 = vmul.f32 %v17, %v80
  %v86 = vmul.f32 %v18, %v80
  %v87 = vmul.f32 %v19, %v80
  %v88 = vmul.f32 %v20, %v80
  %v89 = vmul.f32 %v21, %v80
  %v90 = vmul.f32 %v22, %v80
  %v91 = vmul.f32 %v23, %v80
  %v92 = vmul.f32 %v24, %v80
  %v93 = vmul.f32 %v25, %v80
  %v94 = vmul.f32 %v26, %v80
  %v95 = vmul.f32 %v27, %v80
  %v96 = vmul.f32 %v28, %v80
  %v97 = vmul.f32 %v29, %v80
  %v98 = vmul.f32 %v30, %v80
  %v99 = vmul.f32 %v31, %v80
  %v100 = vmul.f32 %v32, %v80
  %v101 = vmul.f32 %v33, %v80
  %v102 = vmul.f32 %v34, %v80
  %v103 = vmul.f32 %v35, %v80
  %v104 = vmul.f32 %v36, %v80
  %v105 = vmul.f32 %v37, %v80
  %v106 = vmul.f32 %v38, %v80
  %v107 = vmul.f32 %v39, %v80
  %v108 = vmul.f32 %v40, %v80
  %v109 = vmul.f32 %v41, %v80
  %v110 = vmul.f32 %v42, %v80
  %v111 = vmul.f32 %v43, %v80
  %v112 = vmul.f32 %v44, %v80
  %v113 = vmul.f32 %v45, %v80
  %v114 = vmul.f32 %v46, %v80
  %v115 = vmul.f32 %v47, %v80
  %v116 = vmul.f32 %v48, %v80
  %v117 = vmul.f32 %v49, %v80
  %v118 = vmul.f32 %v50, %v80
  %v119 = vmul.f32 %v51, %v80
  %v120 = vmul.f32 %v52, %v80
  %v121 = vmul.f32 %v53, %v80
  %v122 = vmul.f32 %v54, %v80
  %v123 = vmul.f32 %v55, %v80
  %v124 = vmul.f32 %v56, %v80
  %v125 = vmul.f32 %v57, %v80
  %v126 = vmul.f32 %v58, %v80
  %v127 = vmul.f32 %v59, %v80
  %v128 = vmul.f32 %v60, %v80
  %v129 = vmul.f32 %v61, %v80
  %v130 = vmul.f32 %v62, %v80
  %v131 = vmul.f32 %v63, %v80
  %v132 = vmul.f32 %v64, %v80
  %v133 = vmul.f32 %v65, %v80
  %v134 = vmul.f32 %v66, %v80
  %v135 = vmul.f32 %v67, %v80
  %v136 = vmul.f32 %v68, %v80
  %v137 = vmul.f32 %v69, %v80
  %v138 = vmul.f32 %v70, %v80
  %v139 = vmul.f32 %v71, %v80
  %v140 = vmul.f32 %v72, %v80
  %v141 = vmul.f32 %v73, %v80
  %v142 = vmul.f32 %v74, %v80
  %v143 = vmul.f32 %v75, %v80
  %v144 = vmul.f32 %v76, %v80
  %v145 = vmul.f32 %v77, %v80
  %v146 = vld [vmem:[%s2] sm:$0x1]
  %v148 = vperm.slane %v146, 0
  %v150 = vadd.f32 %v82, %v148
  %v151 = vadd.f32 %v83, %v148
  %v152 = vadd.f32 %v84, %v148
  %v153 = vadd.f32 %v85, %v148
  %v154 = vadd.f32 %v86, %v148
  %v155 = vadd.f32 %v87, %v148
  %v156 = vadd.f32 %v88, %v148
  %v157 = vadd.f32 %v89, %v148
  %v158 = vadd.f32 %v90, %v148
  %v159 = vadd.f32 %v91, %v148
  %v160 = vadd.f32 %v92, %v148
  %v161 = vadd.f32 %v93, %v148
  %v162 = vadd.f32 %v94, %v148
  %v163 = vadd.f32 %v95, %v148
  %v164 = vadd.f32 %v96, %v148
  %v165 = vadd.f32 %v97, %v148
  %v166 = vadd.f32 %v98, %v148
  %v167 = vadd.f32 %v99, %v148
  %v168 = vadd.f32 %v100, %v148
  %v169 = vadd.f32 %v101, %v148
  %v170 = vadd.f32 %v102, %v148
  %v171 = vadd.f32 %v103, %v148
  %v172 = vadd.f32 %v104, %v148
  %v173 = vadd.f32 %v105, %v148
  %v174 = vadd.f32 %v106, %v148
  %v175 = vadd.f32 %v107, %v148
  %v176 = vadd.f32 %v108, %v148
  %v177 = vadd.f32 %v109, %v148
  %v178 = vadd.f32 %v110, %v148
  %v179 = vadd.f32 %v111, %v148
  %v180 = vadd.f32 %v112, %v148
  %v181 = vadd.f32 %v113, %v148
  %v182 = vadd.f32 %v114, %v148
  %v183 = vadd.f32 %v115, %v148
  %v184 = vadd.f32 %v116, %v148
  %v185 = vadd.f32 %v117, %v148
  %v186 = vadd.f32 %v118, %v148
  %v187 = vadd.f32 %v119, %v148
  %v188 = vadd.f32 %v120, %v148
  %v189 = vadd.f32 %v121, %v148
  %v190 = vadd.f32 %v122, %v148
  %v191 = vadd.f32 %v123, %v148
  %v192 = vadd.f32 %v124, %v148
  %v193 = vadd.f32 %v125, %v148
  %v194 = vadd.f32 %v126, %v148
  %v195 = vadd.f32 %v127, %v148
  %v196 = vadd.f32 %v128, %v148
  %v197 = vadd.f32 %v129, %v148
  %v198 = vadd.f32 %v130, %v148
  %v199 = vadd.f32 %v131, %v148
  %v200 = vadd.f32 %v132, %v148
  %v201 = vadd.f32 %v133, %v148
  %v202 = vadd.f32 %v134, %v148
  %v203 = vadd.f32 %v135, %v148
  %v204 = vadd.f32 %v136, %v148
  %v205 = vadd.f32 %v137, %v148
  %v206 = vadd.f32 %v138, %v148
  %v207 = vadd.f32 %v139, %v148
  %v208 = vadd.f32 %v140, %v148
  %v209 = vadd.f32 %v141, %v148
  %v210 = vadd.f32 %v142, %v148
  %v211 = vadd.f32 %v143, %v148
  %v212 = vadd.f32 %v144, %v148
  %v213 = vadd.f32 %v145, %v148
  %v214 = vmax.f32 %v150, 0.0
  %v215 = vmax.f32 %v151, 0.0
  %v216 = vmax.f32 %v152, 0.0
  %v217 = vmax.f32 %v153, 0.0
  %v218 = vmax.f32 %v154, 0.0
  %v219 = vmax.f32 %v155, 0.0
  %v220 = vmax.f32 %v156, 0.0
  %v221 = vmax.f32 %v157, 0.0
  %v222 = vmax.f32 %v158, 0.0
  %v223 = vmax.f32 %v159, 0.0
  %v224 = vmax.f32 %v160, 0.0
  %v225 = vmax.f32 %v161, 0.0
  %v226 = vmax.f32 %v162, 0.0
  %v227 = vmax.f32 %v163, 0.0
  %v228 = vmax.f32 %v164, 0.0
  %v229 = vmax.f32 %v165, 0.0
  %v230 = vmax.f32 %v166, 0.0
  %v231 = vmax.f32 %v167, 0.0
  %v232 = vmax.f32 %v168, 0.0
  %v233 = vmax.f32 %v169, 0.0
  %v234 = vmax.f32 %v170, 0.0
  %v235 = vmax.f32 %v171, 0.0
  %v236 = vmax.f32 %v172, 0.0
  %v237 = vmax.f32 %v173, 0.0
  %v238 = vmax.f32 %v174, 0.0
  %v239 = vmax.f32 %v175, 0.0
  %v240 = vmax.f32 %v176, 0.0
  %v241 = vmax.f32 %v177, 0.0
  %v242 = vmax.f32 %v178, 0.0
  %v243 = vmax.f32 %v179, 0.0
  %v244 = vmax.f32 %v180, 0.0
  %v245 = vmax.f32 %v181, 0.0
  %v246 = vmax.f32 %v182, 0.0
  %v247 = vmax.f32 %v183, 0.0
  %v248 = vmax.f32 %v184, 0.0
  %v249 = vmax.f32 %v185, 0.0
  %v250 = vmax.f32 %v186, 0.0
  %v251 = vmax.f32 %v187, 0.0
  %v252 = vmax.f32 %v188, 0.0
  %v253 = vmax.f32 %v189, 0.0
  %v254 = vmax.f32 %v190, 0.0
  %v255 = vmax.f32 %v191, 0.0
  %v256 = vmax.f32 %v192, 0.0
  %v257 = vmax.f32 %v193, 0.0
  %v258 = vmax.f32 %v194, 0.0
  %v259 = vmax.f32 %v195, 0.0
  %v260 = vmax.f32 %v196, 0.0
  %v261 = vmax.f32 %v197, 0.0
  %v262 = vmax.f32 %v198, 0.0
  %v263 = vmax.f32 %v199, 0.0
  %v264 = vmax.f32 %v200, 0.0
  %v265 = vmax.f32 %v201, 0.0
  %v266 = vmax.f32 %v202, 0.0
  %v267 = vmax.f32 %v203, 0.0
  %v268 = vmax.f32 %v204, 0.0
  %v269 = vmax.f32 %v205, 0.0
  %v270 = vmax.f32 %v206, 0.0
  %v271 = vmax.f32 %v207, 0.0
  %v272 = vmax.f32 %v208, 0.0
  %v273 = vmax.f32 %v209, 0.0
  %v274 = vmax.f32 %v210, 0.0
  %v275 = vmax.f32 %v211, 0.0
  %v276 = vmax.f32 %v212, 0.0
  %v277 = vmax.f32 %v213, 0.0
  %v278 = vpack.c.bf16 %v214, %v214
  %v279 = vpack.c.bf16 %v215, %v215
  %v280 = vpack.c.bf16 %v216, %v216
  %v281 = vpack.c.bf16 %v217, %v217
  %v282 = vpack.c.bf16 %v218, %v218
  %v283 = vpack.c.bf16 %v219, %v219
  %v284 = vpack.c.bf16 %v220, %v220
  %v285 = vpack.c.bf16 %v221, %v221
  %v286 = vpack.c.bf16 %v222, %v222
  %v287 = vpack.c.bf16 %v223, %v223
  %v288 = vpack.c.bf16 %v224, %v224
  %v289 = vpack.c.bf16 %v225, %v225
  %v290 = vpack.c.bf16 %v226, %v226
  %v291 = vpack.c.bf16 %v227, %v227
  %v292 = vpack.c.bf16 %v228, %v228
  %v293 = vpack.c.bf16 %v229, %v229
  %v294 = vpack.c.bf16 %v230, %v230
  %v295 = vpack.c.bf16 %v231, %v231
  %v296 = vpack.c.bf16 %v232, %v232
  %v297 = vpack.c.bf16 %v233, %v233
  %v298 = vpack.c.bf16 %v234, %v234
  %v299 = vpack.c.bf16 %v235, %v235
  %v300 = vpack.c.bf16 %v236, %v236
  %v301 = vpack.c.bf16 %v237, %v237
  %v302 = vpack.c.bf16 %v238, %v238
  %v303 = vpack.c.bf16 %v239, %v239
  %v304 = vpack.c.bf16 %v240, %v240
  %v305 = vpack.c.bf16 %v241, %v241
  %v306 = vpack.c.bf16 %v242, %v242
  %v307 = vpack.c.bf16 %v243, %v243
  %v308 = vpack.c.bf16 %v244, %v244
  %v309 = vpack.c.bf16 %v245, %v245
  %v310 = vpack.c.bf16 %v246, %v246
  %v311 = vpack.c.bf16 %v247, %v247
  %v312 = vpack.c.bf16 %v248, %v248
  %v313 = vpack.c.bf16 %v249, %v249
  %v314 = vpack.c.bf16 %v250, %v250
  %v315 = vpack.c.bf16 %v251, %v251
  %v316 = vpack.c.bf16 %v252, %v252
  %v317 = vpack.c.bf16 %v253, %v253
  %v318 = vpack.c.bf16 %v254, %v254
  %v319 = vpack.c.bf16 %v255, %v255
  %v320 = vpack.c.bf16 %v256, %v256
  %v321 = vpack.c.bf16 %v257, %v257
  %v322 = vpack.c.bf16 %v258, %v258
  %v323 = vpack.c.bf16 %v259, %v259
  %v324 = vpack.c.bf16 %v260, %v260
  %v325 = vpack.c.bf16 %v261, %v261
  %v326 = vpack.c.bf16 %v262, %v262
  %v327 = vpack.c.bf16 %v263, %v263
  %v328 = vpack.c.bf16 %v264, %v264
  %v329 = vpack.c.bf16 %v265, %v265
  %v330 = vpack.c.bf16 %v266, %v266
  %v331 = vpack.c.bf16 %v267, %v267
  %v332 = vpack.c.bf16 %v268, %v268
  %v333 = vpack.c.bf16 %v269, %v269
  %v334 = vpack.c.bf16 %v270, %v270
  %v335 = vpack.c.bf16 %v271, %v271
  %v336 = vpack.c.bf16 %v272, %v272
  %v337 = vpack.c.bf16 %v273, %v273
  %v338 = vpack.c.bf16 %v274, %v274
  %v339 = vpack.c.bf16 %v275, %v275
  %v340 = vpack.c.bf16 %v276, %v276
  %v341 = vpack.c.bf16 %v277, %v277
  %342 = vst [vmem:[%s3] sm:$0xf] %v278
  %343 = vst [vmem:[%s3 + $0x4] sm:$0xf] %v279
  %344 = vst [vmem:[%s3 + $0x8] sm:$0xf] %v280
  %345 = vst [vmem:[%s3 + $0xc] sm:$0xf] %v281
  %346 = vst [vmem:[%s3 + $0x10] sm:$0xf] %v282
  %347 = vst [vmem:[%s3 + $0x14] sm:$0xf] %v283
  %348 = vst [vmem:[%s3 + $0x18] sm:$0xf] %v284
  %349 = vst [vmem:[%s3 + $0x1c] sm:$0xf] %v285
  %350 = vst [vmem:[%s3 + $0x20] sm:$0xf] %v286
  %351 = vst [vmem:[%s3 + $0x24] sm:$0xf] %v287
  %352 = vst [vmem:[%s3 + $0x28] sm:$0xf] %v288
  %353 = vst [vmem:[%s3 + $0x2c] sm:$0xf] %v289
  %354 = vst [vmem:[%s3 + $0x30] sm:$0xf] %v290
  %355 = vst [vmem:[%s3 + $0x34] sm:$0xf] %v291
  %356 = vst [vmem:[%s3 + $0x38] sm:$0xf] %v292
  %357 = vst [vmem:[%s3 + $0x3c] sm:$0xf] %v293
  %358 = vst [vmem:[%s3 + $0x40] sm:$0xf] %v294
  %359 = vst [vmem:[%s3 + $0x44] sm:$0xf] %v295
  %360 = vst [vmem:[%s3 + $0x48] sm:$0xf] %v296
  %361 = vst [vmem:[%s3 + $0x4c] sm:$0xf] %v297
  %362 = vst [vmem:[%s3 + $0x50] sm:$0xf] %v298
  %363 = vst [vmem:[%s3 + $0x54] sm:$0xf] %v299
  %364 = vst [vmem:[%s3 + $0x58] sm:$0xf] %v300
  %365 = vst [vmem:[%s3 + $0x5c] sm:$0xf] %v301
  %366 = vst [vmem:[%s3 + $0x60] sm:$0xf] %v302
  %367 = vst [vmem:[%s3 + $0x64] sm:$0xf] %v303
  %368 = vst [vmem:[%s3 + $0x68] sm:$0xf] %v304
  %369 = vst [vmem:[%s3 + $0x6c] sm:$0xf] %v305
  %370 = vst [vmem:[%s3 + $0x70] sm:$0xf] %v306
  %371 = vst [vmem:[%s3 + $0x74] sm:$0xf] %v307
  %372 = vst [vmem:[%s3 + $0x78] sm:$0xf] %v308
  %373 = vst [vmem:[%s3 + $0x7c] sm:$0xf] %v309
  %374 = vst [vmem:[%s3 + $0x80] sm:$0xf] %v310
  %375 = vst [vmem:[%s3 + $0x84] sm:$0xf] %v311
  %376 = vst [vmem:[%s3 + $0x88] sm:$0xf] %v312
  %377 = vst [vmem:[%s3 + $0x8c] sm:$0xf] %v313
  %378 = vst [vmem:[%s3 + $0x90] sm:$0xf] %v314
  %379 = vst [vmem:[%s3 + $0x94] sm:$0xf] %v315
  %380 = vst [vmem:[%s3 + $0x98] sm:$0xf] %v316
  %381 = vst [vmem:[%s3 + $0x9c] sm:$0xf] %v317
  %382 = vst [vmem:[%s3 + $0xa0] sm:$0xf] %v318
  %383 = vst [vmem:[%s3 + $0xa4] sm:$0xf] %v319
  %384 = vst [vmem:[%s3 + $0xa8] sm:$0xf] %v320
  %385 = vst [vmem:[%s3 + $0xac] sm:$0xf] %v321
  %386 = vst [vmem:[%s3 + $0xb0] sm:$0xf] %v322
  %387 = vst [vmem:[%s3 + $0xb4] sm:$0xf] %v323
  %388 = vst [vmem:[%s3 + $0xb8] sm:$0xf] %v324
  %389 = vst [vmem:[%s3 + $0xbc] sm:$0xf] %v325
  %390 = vst [vmem:[%s3 + $0xc0] sm:$0xf] %v326
  %391 = vst [vmem:[%s3 + $0xc4] sm:$0xf] %v327
  %392 = vst [vmem:[%s3 + $0xc8] sm:$0xf] %v328
  %393 = vst [vmem:[%s3 + $0xcc] sm:$0xf] %v329
  %394 = vst [vmem:[%s3 + $0xd0] sm:$0xf] %v330
  %395 = vst [vmem:[%s3 + $0xd4] sm:$0xf] %v331
  %396 = vst [vmem:[%s3 + $0xd8] sm:$0xf] %v332
  %397 = vst [vmem:[%s3 + $0xdc] sm:$0xf] %v333
  %398 = vst [vmem:[%s3 + $0xe0] sm:$0xf] %v334
  %399 = vst [vmem:[%s3 + $0xe4] sm:$0xf] %v335
  %400 = vst [vmem:[%s3 + $0xe8] sm:$0xf] %v336
  %401 = vst [vmem:[%s3 + $0xec] sm:$0xf] %v337
  %402 = vst [vmem:[%s3 + $0xf0] sm:$0xf] %v338
  %403 = vst [vmem:[%s3 + $0xf4] sm:$0xf] %v339
  %404 = vst [vmem:[%s3 + $0xf8] sm:$0xf] %v340
  %405 = vst [vmem:[%s3 + $0xfc] sm:$0xf] %v341
  // Predicated region
  $region14: #{_lambda_.5} parent=0 // pred_check
    _
  $region15: #{_lambda_.5} parent=0 // pred_check_branch
    %407 = sbr.rel (0) target = $region17
  $region16: #{_lambda_.5} parent=0 // pred_region
    _
  $region17: #{_lambda_.5} parent=0 // pred_fallthru
    _
  // Predicated region
  $region18: #{_lambda_.5} parent=0 // pred_check
    _
  $region19: #{_lambda_.5} parent=0 // pred_check_branch
    %409 = sbr.rel (0) target = $region21
  $region20: #{_lambda_.5} parent=0 // pred_region
    _
  $region21: #{_lambda_.5} parent=0 // pred_fallthru
    _

// kernel: _lambda_.4
$region0: #{_lambda_.4}
  #allocation0 [shape = 'u32[]', space=smem, size = 0x4, offset = 0x4, fixed_abs, tag = 'smem constant byte address 0x4 - core index']
  #allocation1 [shape = 'u32[72,128]{1,0:T(1,128)}', space=vmem, size = 0x9000, scoped, tag = 'internal scratch']
  #allocation2 [shape = 'f32[256,128]{1,0:T(8,128)}', space=vmem, size = 0x20000, scoped, tag = 'scratch operand']
  %s0 = inlined_call_operand.vmem [shape: bf16[512,128], index: 0, kind: input, shape index: {}]
  %s1 = inlined_call_operand.vmem [shape: bf16[128,128], index: 1, kind: input, shape index: {}]
  %s2 = inlined_call_operand.vmem [shape: f32[512,128], index: 2, kind: output, shape index: {0}]
  %s3 = inlined_call_operand.vmem [shape: f32[16,128], index: 3, kind: output, shape index: {1}]
  %4 = xla_tuple %s2, %s3
  %s5 = sld [smem:[#allocation0]]
  $region61: #{_lambda_.4} parent=0
    _
  %s7 = ssub.s32 1, %s5
  %s8 = scalar_select 0, %s7, %s5
  loop: start=0, step=1, limit=4
  $region2: #{_lambda_.4} parent=0 // loop_pre_header
    _
  $region3: #{_lambda_.4} parent=0 // loop_header
    %s10 = sphi 0, %s14
    %p11 = scmp.ge.s32.totalorder %s10, 4
    %s17 = sphi 0, %s29
    %s18 = sphi 0, %s25
    %s19 = sphi 0, %s17
    %s20 = sphi 0, %s18
    %s21 = sphi 0, %s19
    %s22 = sphi 0, %s20
    %s34 = sphi 0, %s36
    %s37 = sphi 0, %s34
    %s38 = sphi 0, %s37
    %s54 = sphi 0, %s38
    %s60 = sphi 0, %s62
    %s63 = sphi 0, %s60
    %s64 = sphi 0, %s63
    %s80 = sphi 0, %s64
    %s86 = sphi 0, %s88
    %s89 = sphi 0, %s86
    %s90 = sphi 0, %s89
    %s106 = sphi 0, %s90
    %s110 = sphi 0, %s110
    %s112 = sphi 0, %s110
    %s113 = sphi 0, %s112
    %s127 = sphi 0, %s113
  $region4: #{_lambda_.4} parent=0 // loop_header_branch
    %13 = sbr.rel (%p11) target = $region8
  $region5: #{_lambda_.4} parent=0 // loop_body
    %s15 = ssub.s32 %s10, 1
    %s16 = ssub.s32 %s10, 2
    %s23 = sadd.s32 1, %s18
    %p24 = scmp.ge.s32.totalorder %s23, 1
    %s25 = scalar_select %p24, 0, %s23
    %s26 = sadd.s32 1, %s17
    %s27 = scalar_select %p24, %s26, %s17
    %p28 = scmp.ge.s32.totalorder %s27, 2
    %s29 = scalar_select %p28, 0, %s27
    %s30 = ssub.s32 %s17, %s29
    %s31 = ssub.s32 %s18, %s25
    %s32 = sor.u32 %s30, %s31
    %p33 = scmp.eq.s32.totalorder %s32, 0
    %s35 = sadd.s32 %s34, 1
    %s36 = scalar_select %p33, %s34, %s35
    %p39 = pneg %p33
    %p40 = scmp.eq.s32.totalorder %s10, 1
    %p41 = por %p39, %p40
    %p42 = scmp.ne.s32.totalorder %s34, %s37
    %p43 = scmp.eq.s32.totalorder %s10, 0
    %p44 = por %p42, %p43
    %p45 = scmp.ne.s32.totalorder %s34, %s37
    %p46 = scmp.eq.s32.totalorder %s15, 1
    %p47 = por %p45, %p46
    %p48 = scmp.ne.s32.totalorder %s37, %s38
    %p49 = scmp.eq.s32.totalorder %s15, 0
    %p50 = por %p48, %p49
    %p51 = scmp.ne.s32.totalorder %s37, %s38
    %p52 = scmp.eq.s32.totalorder %s16, 1
    %p53 = por %p51, %p52
    %p55 = scmp.ne.s32.totalorder %s38, %s54
    %p56 = scmp.eq.s32.totalorder %s16, 0
    %p57 = por %p55, %p56
    %s58 = ssub.s32 %s18, %s25
    %p59 = scmp.eq.s32.totalorder %s58, 0
    %s61 = sadd.s32 %s60, 1
    %s62 = scalar_select %p59, %s60, %s61
    %p65 = pneg %p59
    %p66 = scmp.eq.s32.totalorder %s10, 1
    %p67 = por %p65, %p66
    %p68 = scmp.ne.s32.totalorder %s60, %s63
    %p69 = scmp.eq.s32.totalorder %s10, 0
    %p70 = por %p68, %p69
    %p71 = scmp.ne.s32.totalorder %s60, %s63
    %p72 = scmp.eq.s32.totalorder %s15, 1
    %p73 = por %p71, %p72
    %p74 = scmp.ne.s32.totalorder %s63, %s64
    %p75 = scmp.eq.s32.totalorder %s15, 0
    %p76 = por %p74, %p75
    %p77 = scmp.ne.s32.totalorder %s63, %s64
    %p78 = scmp.eq.s32.totalorder %s16, 1
    %p79 = por %p77, %p78
    %p81 = scmp.ne.s32.totalorder %s64, %s80
    %p82 = scmp.eq.s32.totalorder %s16, 0
    %p83 = por %p81, %p82
    %s84 = ssub.s32 %s17, %s29
    %p85 = scmp.eq.s32.totalorder %s84, 0
    %s87 = sadd.s32 %s86, 1
    %s88 = scalar_select %p85, %s86, %s87
    %p91 = pneg %p85
    %p92 = scmp.eq.s32.totalorder %s10, 1
    %p93 = por %p91, %p92
    %p94 = scmp.ne.s32.totalorder %s86, %s89
    %p95 = scmp.eq.s32.totalorder %s10, 0
    %p96 = por %p94, %p95
    %p97 = scmp.ne.s32.totalorder %s86, %s89
    %p98 = scmp.eq.s32.totalorder %s15, 1
    %p99 = por %p97, %p98
    %p100 = scmp.ne.s32.totalorder %s89, %s90
    %p101 = scmp.eq.s32.totalorder %s15, 0
    %p102 = por %p100, %p101
    %p103 = scmp.ne.s32.totalorder %s89, %s90
    %p104 = scmp.eq.s32.totalorder %s16, 1
    %p105 = por %p103, %p104
    %p107 = scmp.ne.s32.totalorder %s90, %s106
    %p108 = scmp.eq.s32.totalorder %s16, 0
    %p109 = por %p107, %p108
    %s111 = sadd.s32 %s110, 1
    %p114 = scmp.eq.s32.totalorder %s10, 1
    %p115 = scmp.ne.s32.totalorder %s110, %s112
    %p116 = scmp.eq.s32.totalorder %s10, 0
    %p117 = por %p115, %p116
    %p118 = scmp.ne.s32.totalorder %s110, %s112
    %p119 = scmp.eq.s32.totalorder %s15, 1
    %p120 = por %p118, %p119
    %p121 = scmp.ne.s32.totalorder %s112, %s113
    %p122 = scmp.eq.s32.totalorder %s15, 0
    %p123 = por %p121, %p122
    %p124 = scmp.ne.s32.totalorder %s112, %s113
    %p125 = scmp.eq.s32.totalorder %s16, 1
    %p126 = por %p124, %p125
    %p128 = scmp.ne.s32.totalorder %s113, %s127
    %p129 = scmp.eq.s32.totalorder %s16, 0
    %p130 = por %p128, %p129
    %p131 = scmp.le.s32.totalorder 1, %s10
    %p132 = scmp.lt.s32.totalorder %s10, 3
    %p133 = pnand %p131, %p132
    %p134 = pneg %p133
    // Predicated region
    $region9: #{_lambda_.4} parent=5 // pred_check
      _
    $region10: #{_lambda_.4} parent=5 // pred_check_branch
      %136 = sbr.rel (%p133) target = $region12
    $region11: #{_lambda_.4} parent=5 // pred_region
      %s137 = ssub.s32 %s10, 1
      // Predicated region
      $region13: #{_lambda_.4} parent=11 // pred_check
        %p138 = pneg %p76
      $region14: #{_lambda_.4} parent=11 // pred_check_branch
        %140 = sbr.rel (%p138) target = $region16
      $region15: #{_lambda_.4} parent=11 // pred_region
        %s141 = smul.u32 16, %s20
        %p142 = scmp.lt.s32.totalorder %s141, 15
        %s143 = scalar_select %p142, %s141, 15
        %s144 = smul.addr %s143, 4
        %s145 = scalar_lea.vmem %s1, %s144
        %s146 = smul.u32 16, %s20
      $region16: #{_lambda_.4} parent=11 // pred_fallthru
        _
    $region12: #{_lambda_.4} parent=5 // pred_fallthru
      _
    %p147 = scmp.lt.s32.totalorder %s10, 2
    // Predicated region
    $region17: #{_lambda_.4} parent=5 // pred_check
      %p148 = pneg %p147
    $region18: #{_lambda_.4} parent=5 // pred_check_branch
      %150 = sbr.rel (%p148) target = $region20
    $region19: #{_lambda_.4} parent=5 // pred_region
      // Predicated region
      $region21: #{_lambda_.4} parent=19 // pred_check
        %p151 = pneg %p44
      $region22: #{_lambda_.4} parent=19 // pred_check_branch
        %153 = sbr.rel (%p151) target = $region24
      $region23: #{_lambda_.4} parent=19 // pred_region
        %s154 = smul.u32 32, %s17
        %p155 = scmp.lt.s32.totalorder %s154, 63
        %s156 = scalar_select %p155, %s154, 63
        %p157 = scmp.lt.s32.totalorder %s18, 0
        %s158 = scalar_select %p157, %s18, 0
        %s159 = sadd.s32 %s158, %s156
        %s160 = smul.addr %s159, 4
        %s161 = scalar_lea.vmem %s0, %s160
        %s162 = smul.u32 32, %s17
      $region24: #{_lambda_.4} parent=19 // pred_fallthru
        _
    $region20: #{_lambda_.4} parent=5 // pred_fallthru
      _
    %p163 = scmp.le.s32.totalorder 1, %s10
    %p164 = scmp.lt.s32.totalorder %s10, 3
    %p165 = pnand %p163, %p164
    %p166 = pneg %p165
    // Predicated region
    $region25: #{_lambda_.4} parent=5 // pred_check
      _
    $region26: #{_lambda_.4} parent=5 // pred_check_branch
      %168 = sbr.rel (%p165) target = $region28
    $region27: #{_lambda_.4} parent=5 // pred_region
      %s169 = ssub.s32 %s10, 1
      %s170 = smul.u32 32, %s19
      %p171 = scmp.lt.s32.totalorder %s170, 63
      %s172 = scalar_select %p171, %s170, 63
      %p173 = scmp.lt.s32.totalorder %s20, 0
      %s174 = scalar_select %p173, %s20, 0
      %s175 = sadd.s32 %s174, %s172
      %s176 = smul.addr %s175, 4
      %s177 = scalar_lea.vmem %s0, %s176
      %p178 = pneg %p50
      %p179 = pneg %p47
      %s180 = smul.u32 16, %s20
      %p181 = scmp.lt.s32.totalorder %s180, 15
      %s182 = scalar_select %p181, %s180, 15
      %s183 = smul.addr %s182, 4
      %s184 = scalar_lea.vmem %s1, %s183
      %p185 = pneg %p76
      %p186 = pneg %p73
      %p187 = pneg %p102
      %p188 = pneg %p99
      %s189 = smul.u32 32, %s19
      %p190 = scmp.lt.s32.totalorder %s189, 63
      %s191 = scalar_select %p190, %s189, 63
      %s192 = smul.addr %s191, 8
      %s193 = scalar_lea.vmem %s2, %s192
      %p194 = pneg %p123
      %p195 = pneg %p120
      %s196 = smul.u32 32, %s19
      %p197 = scmp.lt.s32.totalorder %s196, 63
      %s198 = scalar_select %p197, %s196, 63
      %p199 = scmp.lt.s32.totalorder %s20, 0
      %s200 = scalar_select %p199, %s20, 0
      %s201 = sadd.s32 %s200, %s198
      %s202 = smul.addr %s201, 4
      %s203 = scalar_lea.vmem %s0, %s202
      %s204 = smul.u32 32, %s19
      %s205 = smul.u32 16, %s20
      %p206 = scmp.lt.s32.totalorder %s205, 15
      %s207 = scalar_select %p206, %s205, 15
      %s208 = smul.addr %s207, 4
      %s209 = scalar_lea.vmem %s1, %s208
      %s210 = smul.u32 16, %s20
      %s211 = smul.u32 32, %s19
      %p212 = scmp.lt.s32.totalorder %s211, 63
      %s213 = scalar_select %p212, %s211, 63
      %s214 = smul.addr %s213, 8
      %s215 = scalar_lea.vmem %s2, %s214
      %s216 = smul.u32 32, %s19
      %p217 = scmp.eq.s32.totalorder %s19, 0
      %p218 = scmp.eq.s32.totalorder %s20, 0
      %p219 = pnand %p217, %p218
      %p220 = pneg %p219
      // Predicated region
      $region29: #{_lambda_.4} parent=27 // pred_check
        _
      $region30: #{_lambda_.4} parent=27 // pred_check_branch
        %222 = sbr.rel (%p219) target = $region32
      $region31: #{_lambda_.4} parent=27 // pred_region
        %223 = vst [vmem:[%s3] sm:$0xff] 0.0
        %224 = vst [vmem:[%s3 + $0x8] sm:$0xff] 0.0
      $region32: #{_lambda_.4} parent=27 // pred_fallthru
        _
      // Predicated region
      $region33: #{_lambda_.4} parent=27 // pred_check
        %p225 = pneg %p218
      $region34: #{_lambda_.4} parent=27 // pred_check_branch
        %227 = sbr.rel (%p225) target = $region36
      $region35: #{_lambda_.4} parent=27 // pred_region
        %228 = vst [vmem:[#allocation2] sm:$0xff] 0.0
        %229 = vst [vmem:[#allocation2 + $0x8] sm:$0xff] 0.0
        %230 = vst [vmem:[#allocation2 + $0x10] sm:$0xff] 0.0
        %231 = vst [vmem:[#allocation2 + $0x18] sm:$0xff] 0.0
        %232 = vst [vmem:[#allocation2 + $0x20] sm:$0xff] 0.0
        %233 = vst [vmem:[#allocation2 + $0x28] sm:$0xff] 0.0
        %234 = vst [vmem:[#allocation2 + $0x30] sm:$0xff] 0.0
        %235 = vst [vmem:[#allocation2 + $0x38] sm:$0xff] 0.0
        %236 = vst [vmem:[#allocation2 + $0x40] sm:$0xff] 0.0
        %237 = vst [vmem:[#allocation2 + $0x48] sm:$0xff] 0.0
        %238 = vst [vmem:[#allocation2 + $0x50] sm:$0xff] 0.0
        %239 = vst [vmem:[#allocation2 + $0x58] sm:$0xff] 0.0
        %240 = vst [vmem:[#allocation2 + $0x60] sm:$0xff] 0.0
        %241 = vst [vmem:[#allocation2 + $0x68] sm:$0xff] 0.0
        %242 = vst [vmem:[#allocation2 + $0x70] sm:$0xff] 0.0
        %243 = vst [vmem:[#allocation2 + $0x78] sm:$0xff] 0.0
        %244 = vst [vmem:[#allocation2 + $0x80] sm:$0xff] 0.0
        %245 = vst [vmem:[#allocation2 + $0x88] sm:$0xff] 0.0
        %246 = vst [vmem:[#allocation2 + $0x90] sm:$0xff] 0.0
        %247 = vst [vmem:[#allocation2 + $0x98] sm:$0xff] 0.0
        %248 = vst [vmem:[#allocation2 + $0xa0] sm:$0xff] 0.0
        %249 = vst [vmem:[#allocation2 + $0xa8] sm:$0xff] 0.0
        %250 = vst [vmem:[#allocation2 + $0xb0] sm:$0xff] 0.0
        %251 = vst [vmem:[#allocation2 + $0xb8] sm:$0xff] 0.0
        %252 = vst [vmem:[#allocation2 + $0xc0] sm:$0xff] 0.0
        %253 = vst [vmem:[#allocation2 + $0xc8] sm:$0xff] 0.0
        %254 = vst [vmem:[#allocation2 + $0xd0] sm:$0xff] 0.0
        %255 = vst [vmem:[#allocation2 + $0xd8] sm:$0xff] 0.0
        %256 = vst [vmem:[#allocation2 + $0xe0] sm:$0xff] 0.0
        %257 = vst [vmem:[#allocation2 + $0xe8] sm:$0xff] 0.0
        %258 = vst [vmem:[#allocation2 + $0xf0] sm:$0xff] 0.0
        %259 = vst [vmem:[#allocation2 + $0xf8] sm:$0xff] 0.0
      $region36: #{_lambda_.4} parent=27 // pred_fallthru
        _
      %v260 = vld [vmem:[#allocation2] sm:$0xff]
      %v261 = vld [vmem:[#allocation2 + $0x8] sm:$0xff]
      %v262 = vld [vmem:[#allocation2 + $0x10] sm:$0xff]
      %v263 = vld [vmem:[#allocation2 + $0x18] sm:$0xff]
      %v264 = vld [vmem:[#allocation2 + $0x20] sm:$0xff]
      %v265 = vld [vmem:[#allocation2 + $0x28] sm:$0xff]
      %v266 = vld [vmem:[#allocation2 + $0x30] sm:$0xff]
      %v267 = vld [vmem:[#allocation2 + $0x38] sm:$0xff]
      %v268 = vld [vmem:[#allocation2 + $0x40] sm:$0xff]
      %v269 = vld [vmem:[#allocation2 + $0x48] sm:$0xff]
      %v270 = vld [vmem:[#allocation2 + $0x50] sm:$0xff]
      %v271 = vld [vmem:[#allocation2 + $0x58] sm:$0xff]
      %v272 = vld [vmem:[#allocation2 + $0x60] sm:$0xff]
      %v273 = vld [vmem:[#allocation2 + $0x68] sm:$0xff]
      %v274 = vld [vmem:[#allocation2 + $0x70] sm:$0xff]
      %v275 = vld [vmem:[#allocation2 + $0x78] sm:$0xff]
      %v276 = vld [vmem:[#allocation2 + $0x80] sm:$0xff]
      %v277 = vld [vmem:[#allocation2 + $0x88] sm:$0xff]
      %v278 = vld [vmem:[#allocation2 + $0x90] sm:$0xff]
      %v279 = vld [vmem:[#allocation2 + $0x98] sm:$0xff]
      %v280 = vld [vmem:[#allocation2 + $0xa0] sm:$0xff]
      %v281 = vld [vmem:[#allocation2 + $0xa8] sm:$0xff]
      %v282 = vld [vmem:[#allocation2 + $0xb0] sm:$0xff]
      %v283 = vld [vmem:[#allocation2 + $0xb8] sm:$0xff]
      %v284 = vld [vmem:[#allocation2 + $0xc0] sm:$0xff]
      %v285 = vld [vmem:[#allocation2 + $0xc8] sm:$0xff]
      %v286 = vld [vmem:[#allocation2 + $0xd0] sm:$0xff]
      %v287 = vld [vmem:[#allocation2 + $0xd8] sm:$0xff]
      %v288 = vld [vmem:[#allocation2 + $0xe0] sm:$0xff]
      %v289 = vld [vmem:[#allocation2 + $0xe8] sm:$0xff]
      %v290 = vld [vmem:[#allocation2 + $0xf0] sm:$0xff]
      %v291 = vld [vmem:[#allocation2 + $0xf8] sm:$0xff]
      %v292 = vld [vmem:[%s203] sm:$0xf]
      %v293 = vld [vmem:[%s203 + $0x4] sm:$0xf]
      %v294 = vld [vmem:[%s203 + $0x8] sm:$0xf]
      %v295 = vld [vmem:[%s203 + $0xc] sm:$0xf]
      %v296 = vld [vmem:[%s203 + $0x10] sm:$0xf]
      %v297 = vld [vmem:[%s203 + $0x14] sm:$0xf]
      %v298 = vld [vmem:[%s203 + $0x18] sm:$0xf]
      %v299 = vld [vmem:[%s203 + $0x1c] sm:$0xf]
      %v300 = vld [vmem:[%s203 + $0x20] sm:$0xf]
      %v301 = vld [vmem:[%s203 + $0x24] sm:$0xf]
      %v302 = vld [vmem:[%s203 + $0x28] sm:$0xf]
      %v303 = vld [vmem:[%s203 + $0x2c] sm:$0xf]
      %v304 = vld [vmem:[%s203 + $0x30] sm:$0xf]
      %v305 = vld [vmem:[%s203 + $0x34] sm:$0xf]
      %v306 = vld [vmem:[%s203 + $0x38] sm:$0xf]
      %v307 = vld [vmem:[%s203 + $0x3c] sm:$0xf]
      %v308 = vld [vmem:[%s203 + $0x40] sm:$0xf]
      %v309 = vld [vmem:[%s203 + $0x44] sm:$0xf]
      %v310 = vld [vmem:[%s203 + $0x48] sm:$0xf]
      %v311 = vld [vmem:[%s203 + $0x4c] sm:$0xf]
      %v312 = vld [vmem:[%s203 + $0x50] sm:$0xf]
      %v313 = vld [vmem:[%s203 + $0x54] sm:$0xf]
      %v314 = vld [vmem:[%s203 + $0x58] sm:$0xf]
      %v315 = vld [vmem:[%s203 + $0x5c] sm:$0xf]
      %v316 = vld [vmem:[%s203 + $0x60] sm:$0xf]
      %v317 = vld [vmem:[%s203 + $0x64] sm:$0xf]
      %v318 = vld [vmem:[%s203 + $0x68] sm:$0xf]
      %v319 = vld [vmem:[%s203 + $0x6c] sm:$0xf]
      %v320 = vld [vmem:[%s203 + $0x70] sm:$0xf]
      %v321 = vld [vmem:[%s203 + $0x74] sm:$0xf]
      %v322 = vld [vmem:[%s203 + $0x78] sm:$0xf]
      %v323 = vld [vmem:[%s203 + $0x7c] sm:$0xf]
      %v324 = vld [vmem:[%s209] sm:$0xf]
      %v325 = vld [vmem:[%s209 + $0x4] sm:$0xf]
      %v326 = vld [vmem:[%s209 + $0x8] sm:$0xf]
      %v327 = vld [vmem:[%s209 + $0xc] sm:$0xf]
      %v328 = vld [vmem:[%s209 + $0x10] sm:$0xf]
      %v329 = vld [vmem:[%s209 + $0x14] sm:$0xf]
      %v330 = vld [vmem:[%s209 + $0x18] sm:$0xf]
      %v331 = vld [vmem:[%s209 + $0x1c] sm:$0xf]
      %v332 = vld [vmem:[%s209 + $0x20] sm:$0xf]
      %v333 = vld [vmem:[%s209 + $0x24] sm:$0xf]
      %v334 = vld [vmem:[%s209 + $0x28] sm:$0xf]
      %v335 = vld [vmem:[%s209 + $0x2c] sm:$0xf]
      %v336 = vld [vmem:[%s209 + $0x30] sm:$0xf]
      %v337 = vld [vmem:[%s209 + $0x34] sm:$0xf]
      %v338 = vld [vmem:[%s209 + $0x38] sm:$0xf]
      %v339 = vld [vmem:[%s209 + $0x3c] sm:$0xf]
      %v372 = vunpack.c.l.b16 %v292
      %v373 = vunpack.c.l.b16 %v293
      %v374 = vunpack.c.l.b16 %v294
      %v375 = vunpack.c.l.b16 %v295
      %v376 = vunpack.c.l.b16 %v296
      %v377 = vunpack.c.l.b16 %v297
      %v378 = vunpack.c.l.b16 %v298
      %v379 = vunpack.c.l.b16 %v299
      %v380 = vunpack.c.l.b16 %v300
      %v381 = vunpack.c.l.b16 %v301
      %v382 = vunpack.c.l.b16 %v302
      %v383 = vunpack.c.l.b16 %v303
      %v384 = vunpack.c.l.b16 %v304
      %v385 = vunpack.c.l.b16 %v305
      %v386 = vunpack.c.l.b16 %v306
      %v387 = vunpack.c.l.b16 %v307
      %v388 = vunpack.c.l.b16 %v308
      %v389 = vunpack.c.l.b16 %v309
      %v390 = vunpack.c.l.b16 %v310
      %v391 = vunpack.c.l.b16 %v311
      %v392 = vunpack.c.l.b16 %v312
      %v393 = vunpack.c.l.b16 %v313
      %v394 = vunpack.c.l.b16 %v314
      %v395 = vunpack.c.l.b16 %v315
      %v396 = vunpack.c.l.b16 %v316
      %v397 = vunpack.c.l.b16 %v317
      %v398 = vunpack.c.l.b16 %v318
      %v399 = vunpack.c.l.b16 %v319
      %v400 = vunpack.c.l.b16 %v320
      %v401 = vunpack.c.l.b16 %v321
      %v402 = vunpack.c.l.b16 %v322
      %v403 = vunpack.c.l.b16 %v323
      %v404 = vpack.c.b16 %v373, %v372
      %v405 = vpack.c.b16 %v375, %v374
      %v406 = vpack.c.b16 %v377, %v376
      %v407 = vpack.c.b16 %v379, %v378
      %v408 = vpack.c.b16 %v381, %v380
      %v409 = vpack.c.b16 %v383, %v382
      %v410 = vpack.c.b16 %v385, %v384
      %v411 = vpack.c.b16 %v387, %v386
      %v412 = vpack.c.b16 %v389, %v388
      %v413 = vpack.c.b16 %v391, %v390
      %v414 = vpack.c.b16 %v393, %v392
      %v415 = vpack.c.b16 %v395, %v394
      %v416 = vpack.c.b16 %v397, %v396
      %v417 = vpack.c.b16 %v399, %v398
      %v418 = vpack.c.b16 %v401, %v400
      %v419 = vpack.c.b16 %v403, %v402
      %v452 = vunpack.c.l.b16 %v324
      %v453 = vunpack.c.l.b16 %v325
      %v454 = vunpack.c.l.b16 %v326
      %v455 = vunpack.c.l.b16 %v327
      %v456 = vunpack.c.l.b16 %v328
      %v457 = vunpack.c.l.b16 %v329
      %v458 = vunpack.c.l.b16 %v330
      %v459 = vunpack.c.l.b16 %v331
      %v460 = vunpack.c.l.b16 %v332
      %v461 = vunpack.c.l.b16 %v333
      %v462 = vunpack.c.l.b16 %v334
      %v463 = vunpack.c.l.b16 %v335
      %v464 = vunpack.c.l.b16 %v336
      %v465 = vunpack.c.l.b16 %v337
      %v466 = vunpack.c.l.b16 %v338
      %v467 = vunpack.c.l.b16 %v339
      %v468 = vpack.c.b16 %v453, %v452
      %v469 = vpack.c.b16 %v455, %v454
      %v470 = vpack.c.b16 %v457, %v456
      %v471 = vpack.c.b16 %v459, %v458
      %v472 = vpack.c.b16 %v461, %v460
      %v473 = vpack.c.b16 %v463, %v462
      %v474 = vpack.c.b16 %v465, %v464
      %v475 = vpack.c.b16 %v467, %v466
      %484 = vmatpush.bf16.msra.mxu0 %v475
      %485 = vmatpush.bf16.msra.mxu0 %v474
      %486 = vmatpush.bf16.msra.mxu0 %v473
      %487 = vmatpush.bf16.msra.mxu0 %v472
      %488 = vmatpush.bf16.msra.mxu0 %v471
      %489 = vmatpush.bf16.msra.mxu0 %v470
      %490 = vmatpush.bf16.msra.mxu0 %v469
      %491 = vmatpush.bf16.msra.mxu0 %v468
      %492 = vmatmul.bf16.gmra.mxu0 %v404
      %v493 = vpop.f32.mrf.mxu0
      %v494 = vadd.f32 0.0, %v493
      %v495 = vpop.f32.mrf.mxu0
      %v496 = vadd.f32 0.0, %v495
      %497 = vmatmul.bf16.gmra.mxu0 %v405
      %v498 = vpop.f32.mrf.mxu0
      %v499 = vadd.f32 0.0, %v498
      %v500 = vpop.f32.mrf.mxu0
      %v501 = vadd.f32 0.0, %v500
      %502 = vmatmul.bf16.gmra.mxu0 %v406
      %v503 = vpop.f32.mrf.mxu0
      %v504 = vadd.f32 0.0, %v503
      %v505 = vpop.f32.mrf.mxu0
      %v506 = vadd.f32 0.0, %v505
      %507 = vmatmul.bf16.gmra.mxu0 %v407
      %v508 = vpop.f32.mrf.mxu0
      %v509 = vadd.f32 0.0, %v508
      %v510 = vpop.f32.mrf.mxu0
      %v511 = vadd.f32 0.0, %v510
      %512 = vmatmul.bf16.gmra.mxu0 %v408
      %v513 = vpop.f32.mrf.mxu0
      %v514 = vadd.f32 0.0, %v513
      %v515 = vpop.f32.mrf.mxu0
      %v516 = vadd.f32 0.0, %v515
      %517 = vmatmul.bf16.gmra.mxu0 %v409
      %v518 = vpop.f32.mrf.mxu0
      %v519 = vadd.f32 0.0, %v518
      %v520 = vpop.f32.mrf.mxu0
      %v521 = vadd.f32 0.0, %v520
      %522 = vmatmul.bf16.gmra.mxu0 %v410
      %v523 = vpop.f32.mrf.mxu0
      %v524 = vadd.f32 0.0, %v523
      %v525 = vpop.f32.mrf.mxu0
      %v526 = vadd.f32 0.0, %v525
      %527 = vmatmul.bf16.gmra.mxu0 %v411
      %v528 = vpop.f32.mrf.mxu0
      %v529 = vadd.f32 0.0, %v528
      %v530 = vpop.f32.mrf.mxu0
      %v531 = vadd.f32 0.0, %v530
      %532 = vmatmul.bf16.gmra.mxu0 %v412
      %v533 = vpop.f32.mrf.mxu0
      %v534 = vadd.f32 0.0, %v533
      %v535 = vpop.f32.mrf.mxu0
      %v536 = vadd.f32 0.0, %v535
      %537 = vmatmul.bf16.gmra.mxu0 %v413
      %v538 = vpop.f32.mrf.mxu0
      %v539 = vadd.f32 0.0, %v538
      %v540 = vpop.f32.mrf.mxu0
      %v541 = vadd.f32 0.0, %v540
      %542 = vmatmul.bf16.gmra.mxu0 %v414
      %v543 = vpop.f32.mrf.mxu0
      %v544 = vadd.f32 0.0, %v543
      %v545 = vpop.f32.mrf.mxu0
      %v546 = vadd.f32 0.0, %v545
      %547 = vmatmul.bf16.gmra.mxu0 %v415
      %v548 = vpop.f32.mrf.mxu0
      %v549 = vadd.f32 0.0, %v548
      %v550 = vpop.f32.mrf.mxu0
      %v551 = vadd.f32 0.0, %v550
      %552 = vmatmul.bf16.gmra.mxu0 %v416
      %v553 = vpop.f32.mrf.mxu0
      %v554 = vadd.f32 0.0, %v553
      %v555 = vpop.f32.mrf.mxu0
      %v556 = vadd.f32 0.0, %v555
      %557 = vmatmul.bf16.gmra.mxu0 %v417
      %v558 = vpop.f32.mrf.mxu0
      %v559 = vadd.f32 0.0, %v558
      %v560 = vpop.f32.mrf.mxu0
      %v561 = vadd.f32 0.0, %v560
      %562 = vmatmul.bf16.gmra.mxu0 %v418
      %v563 = vpop.f32.mrf.mxu0
      %v564 = vadd.f32 0.0, %v563
      %v565 = vpop.f32.mrf.mxu0
      %v566 = vadd.f32 0.0, %v565
      %567 = vmatmul.bf16.gmra.mxu0 %v419
      %v568 = vpop.f32.mrf.mxu0
      %v569 = vadd.f32 0.0, %v568
      %v570 = vpop.f32.mrf.mxu0
      %v571 = vadd.f32 0.0, %v570
      %572 = vdwg.mxu0
      %v573 = vadd.f32 %v260, %v494
      %v574 = vadd.f32 %v261, %v496
      %v575 = vadd.f32 %v262, %v499
      %v576 = vadd.f32 %v263, %v501
      %v577 = vadd.f32 %v264, %v504
      %v578 = vadd.f32 %v265, %v506
      %v579 = vadd.f32 %v266, %v509
      %v580 = vadd.f32 %v267, %v511
      %v581 = vadd.f32 %v268, %v514
      %v582 = vadd.f32 %v269, %v516
      %v583 = vadd.f32 %v270, %v519
      %v584 = vadd.f32 %v271, %v521
      %v585 = vadd.f32 %v272, %v524
      %v586 = vadd.f32 %v273, %v526
      %v587 = vadd.f32 %v274, %v529
      %v588 = vadd.f32 %v275, %v531
      %v589 = vadd.f32 %v276, %v534
      %v590 = vadd.f32 %v277, %v536
      %v591 = vadd.f32 %v278, %v539
      %v592 = vadd.f32 %v279, %v541
      %v593 = vadd.f32 %v280, %v544
      %v594 = vadd.f32 %v281, %v546
      %v595 = vadd.f32 %v282, %v549
      %v596 = vadd.f32 %v283, %v551
      %v597 = vadd.f32 %v284, %v554
      %v598 = vadd.f32 %v285, %v556
      %v599 = vadd.f32 %v286, %v559
      %v600 = vadd.f32 %v287, %v561
      %v601 = vadd.f32 %v288, %v564
      %v602 = vadd.f32 %v289, %v566
      %v603 = vadd.f32 %v290, %v569
      %v604 = vadd.f32 %v291, %v571
      %605 = vst [vmem:[#allocation2] sm:$0xff] %v573
      %606 = vst [vmem:[#allocation2 + $0x8] sm:$0xff] %v574
      %607 = vst [vmem:[#allocation2 + $0x10] sm:$0xff] %v575
      %608 = vst [vmem:[#allocation2 + $0x18] sm:$0xff] %v576
      %609 = vst [vmem:[#allocation2 + $0x20] sm:$0xff] %v577
      %610 = vst [vmem:[#allocation2 + $0x28] sm:$0xff] %v578
      %611 = vst [vmem:[#allocation2 + $0x30] sm:$0xff] %v579
      %612 = vst [vmem:[#allocation2 + $0x38] sm:$0xff] %v580
      %613 = vst [vmem:[#allocation2 + $0x40] sm:$0xff] %v581
      %614 = vst [vmem:[#allocation2 + $0x48] sm:$0xff] %v582
      %615 = vst [vmem:[#allocation2 + $0x50] sm:$0xff] %v583
      %616 = vst [vmem:[#allocation2 + $0x58] sm:$0xff] %v584
      %617 = vst [vmem:[#allocation2 + $0x60] sm:$0xff] %v585
      %618 = vst [vmem:[#allocation2 + $0x68] sm:$0xff] %v586
      %619 = vst [vmem:[#allocation2 + $0x70] sm:$0xff] %v587
      %620 = vst [vmem:[#allocation2 + $0x78] sm:$0xff] %v588
      %621 = vst [vmem:[#allocation2 + $0x80] sm:$0xff] %v589
      %622 = vst [vmem:[#allocation2 + $0x88] sm:$0xff] %v590
      %623 = vst [vmem:[#allocation2 + $0x90] sm:$0xff] %v591
      %624 = vst [vmem:[#allocation2 + $0x98] sm:$0xff] %v592
      %625 = vst [vmem:[#allocation2 + $0xa0] sm:$0xff] %v593
      %626 = vst [vmem:[#allocation2 + $0xa8] sm:$0xff] %v594
      %627 = vst [vmem:[#allocation2 + $0xb0] sm:$0xff] %v595
      %628 = vst [vmem:[#allocation2 + $0xb8] sm:$0xff] %v596
      %629 = vst [vmem:[#allocation2 + $0xc0] sm:$0xff] %v597
      %630 = vst [vmem:[#allocation2 + $0xc8] sm:$0xff] %v598
      %631 = vst [vmem:[#allocation2 + $0xd0] sm:$0xff] %v599
      %632 = vst [vmem:[#allocation2 + $0xd8] sm:$0xff] %v600
      %633 = vst [vmem:[#allocation2 + $0xe0] sm:$0xff] %v601
      %634 = vst [vmem:[#allocation2 + $0xe8] sm:$0xff] %v602
      %635 = vst [vmem:[#allocation2 + $0xf0] sm:$0xff] %v603
      %636 = vst [vmem:[#allocation2 + $0xf8] sm:$0xff] %v604
      // Predicated region
      $region37: #{_lambda_.4} parent=27 // pred_check
        %p637 = pneg %p218
      $region38: #{_lambda_.4} parent=27 // pred_check_branch
        %639 = sbr.rel (%p637) target = $region40
      $region39: #{_lambda_.4} parent=27 // pred_region
        %v640 = vld [vmem:[#allocation2] sm:$0xff]
        %v641 = vld [vmem:[#allocation2 + $0x8] sm:$0xff]
        %v642 = vld [vmem:[#allocation2 + $0x10] sm:$0xff]
        %v643 = vld [vmem:[#allocation2 + $0x18] sm:$0xff]
        %v644 = vld [vmem:[#allocation2 + $0x20] sm:$0xff]
        %v645 = vld [vmem:[#allocation2 + $0x28] sm:$0xff]
        %v646 = vld [vmem:[#allocation2 + $0x30] sm:$0xff]
        %v647 = vld [vmem:[#allocation2 + $0x38] sm:$0xff]
        %v648 = vld [vmem:[#allocation2 + $0x40] sm:$0xff]
        %v649 = vld [vmem:[#allocation2 + $0x48] sm:$0xff]
        %v650 = vld [vmem:[#allocation2 + $0x50] sm:$0xff]
        %v651 = vld [vmem:[#allocation2 + $0x58] sm:$0xff]
        %v652 = vld [vmem:[#allocation2 + $0x60] sm:$0xff]
        %v653 = vld [vmem:[#allocation2 + $0x68] sm:$0xff]
        %v654 = vld [vmem:[#allocation2 + $0x70] sm:$0xff]
        %v655 = vld [vmem:[#allocation2 + $0x78] sm:$0xff]
        %v656 = vld [vmem:[#allocation2 + $0x80] sm:$0xff]
        %v657 = vld [vmem:[#allocation2 + $0x88] sm:$0xff]
        %v658 = vld [vmem:[#allocation2 + $0x90] sm:$0xff]
        %v659 = vld [vmem:[#allocation2 + $0x98] sm:$0xff]
        %v660 = vld [vmem:[#allocation2 + $0xa0] sm:$0xff]
        %v661 = vld [vmem:[#allocation2 + $0xa8] sm:$0xff]
        %v662 = vld [vmem:[#allocation2 + $0xb0] sm:$0xff]
        %v663 = vld [vmem:[#allocation2 + $0xb8] sm:$0xff]
        %v664 = vld [vmem:[#allocation2 + $0xc0] sm:$0xff]
        %v665 = vld [vmem:[#allocation2 + $0xc8] sm:$0xff]
        %v666 = vld [vmem:[#allocation2 + $0xd0] sm:$0xff]
        %v667 = vld [vmem:[#allocation2 + $0xd8] sm:$0xff]
        %v668 = vld [vmem:[#allocation2 + $0xe0] sm:$0xff]
        %v669 = vld [vmem:[#allocation2 + $0xe8] sm:$0xff]
        %v670 = vld [vmem:[#allocation2 + $0xf0] sm:$0xff]
        %v671 = vld [vmem:[#allocation2 + $0xf8] sm:$0xff]
        %672 = vst [vmem:[%s215] sm:$0xff] %v640
        %673 = vst [vmem:[%s215 + $0x8] sm:$0xff] %v641
        %674 = vst [vmem:[%s215 + $0x10] sm:$0xff] %v642
        %675 = vst [vmem:[%s215 + $0x18] sm:$0xff] %v643
        %676 = vst [vmem:[%s215 + $0x20] sm:$0xff] %v644
        %677 = vst [vmem:[%s215 + $0x28] sm:$0xff] %v645
        %678 = vst [vmem:[%s215 + $0x30] sm:$0xff] %v646
        %679 = vst [vmem:[%s215 + $0x38] sm:$0xff] %v647
        %680 = vst [vmem:[%s215 + $0x40] sm:$0xff] %v648
        %681 = vst [vmem:[%s215 + $0x48] sm:$0xff] %v649
        %682 = vst [vmem:[%s215 + $0x50] sm:$0xff] %v650
        %683 = vst [vmem:[%s215 + $0x58] sm:$0xff] %v651
        %684 = vst [vmem:[%s215 + $0x60] sm:$0xff] %v652
        %685 = vst [vmem:[%s215 + $0x68] sm:$0xff] %v653
        %686 = vst [vmem:[%s215 + $0x70] sm:$0xff] %v654
        %687 = vst [vmem:[%s215 + $0x78] sm:$0xff] %v655
        %688 = vst [vmem:[%s215 + $0x80] sm:$0xff] %v656
        %689 = vst [vmem:[%s215 + $0x88] sm:$0xff] %v657
        %690 = vst [vmem:[%s215 + $0x90] sm:$0xff] %v658
        %691 = vst [vmem:[%s215 + $0x98] sm:$0xff] %v659
        %692 = vst [vmem:[%s215 + $0xa0] sm:$0xff] %v660
        %693 = vst [vmem:[%s215 + $0xa8] sm:$0xff] %v661
        %694 = vst [vmem:[%s215 + $0xb0] sm:$0xff] %v662
        %695 = vst [vmem:[%s215 + $0xb8] sm:$0xff] %v663
        %696 = vst [vmem:[%s215 + $0xc0] sm:$0xff] %v664
        %697 = vst [vmem:[%s215 + $0xc8] sm:$0xff] %v665
        %698 = vst [vmem:[%s215 + $0xd0] sm:$0xff] %v666
        %699 = vst [vmem:[%s215 + $0xd8] sm:$0xff] %v667
        %700 = vst [vmem:[%s215 + $0xe0] sm:$0xff] %v668
        %701 = vst [vmem:[%s215 + $0xe8] sm:$0xff] %v669
        %702 = vst [vmem:[%s215 + $0xf0] sm:$0xff] %v670
        %703 = vst [vmem:[%s215 + $0xf8] sm:$0xff] %v671
        %v704 = vld [vmem:[%s3] sm:$0xff]
        %v705 = vadd.f32 %v640, %v641
        %v706 = vadd.f32 %v705, %v642
        %v707 = vadd.f32 %v706, %v643
        %v708 = vadd.f32 %v707, %v644
        %v709 = vadd.f32 %v708, %v645
        %v710 = vadd.f32 %v709, %v646
        %v711 = vadd.f32 %v710, %v647
        %v712 = vadd.f32 %v711, %v648
        %v713 = vadd.f32 %v712, %v649
        %v714 = vadd.f32 %v713, %v650
        %v715 = vadd.f32 %v714, %v651
        %v716 = vadd.f32 %v715, %v652
        %v717 = vadd.f32 %v716, %v653
        %v718 = vadd.f32 %v717, %v654
        %v719 = vadd.f32 %v718, %v655
        %v720 = vadd.f32 %v719, %v656
        %v721 = vadd.f32 %v720, %v657
        %v722 = vadd.f32 %v721, %v658
        %v723 = vadd.f32 %v722, %v659
        %v724 = vadd.f32 %v723, %v660
        %v725 = vadd.f32 %v724, %v661
        %v726 = vadd.f32 %v725, %v662
        %v727 = vadd.f32 %v726, %v663
        %v728 = vadd.f32 %v727, %v664
        %v729 = vadd.f32 %v728, %v665
        %v730 = vadd.f32 %v729, %v666
        %v731 = vadd.f32 %v730, %v667
        %v732 = vadd.f32 %v731, %v668
        %v733 = vadd.f32 %v732, %v669
        %v734 = vadd.f32 %v733, %v670
        %v735 = vadd.f32 %v734, %v671
        %v736 = vadd.f32 %v704, %v735
        %737 = vst [vmem:[%s3] sm:$0xff] %v736
        %v738 = vld [vmem:[%s3 + $0x8] sm:$0xff]
        %v739 = vmul.f32 %v640, %v640
        %v740 = vmul.f32 %v641, %v641
        %v741 = vmul.f32 %v642, %v642
        %v742 = vmul.f32 %v643, %v643
        %v743 = vmul.f32 %v644, %v644
        %v744 = vmul.f32 %v645, %v645
        %v745 = vmul.f32 %v646, %v646
        %v746 = vmul.f32 %v647, %v647
        %v747 = vmul.f32 %v648, %v648
        %v748 = vmul.f32 %v649, %v649
        %v749 = vmul.f32 %v650, %v650
        %v750 = vmul.f32 %v651, %v651
        %v751 = vmul.f32 %v652, %v652
        %v752 = vmul.f32 %v653, %v653
        %v753 = vmul.f32 %v654, %v654
        %v754 = vmul.f32 %v655, %v655
        %v755 = vmul.f32 %v656, %v656
        %v756 = vmul.f32 %v657, %v657
        %v757 = vmul.f32 %v658, %v658
        %v758 = vmul.f32 %v659, %v659
        %v759 = vmul.f32 %v660, %v660
        %v760 = vmul.f32 %v661, %v661
        %v761 = vmul.f32 %v662, %v662
        %v762 = vmul.f32 %v663, %v663
        %v763 = vmul.f32 %v664, %v664
        %v764 = vmul.f32 %v665, %v665
        %v765 = vmul.f32 %v666, %v666
        %v766 = vmul.f32 %v667, %v667
        %v767 = vmul.f32 %v668, %v668
        %v768 = vmul.f32 %v669, %v669
        %v769 = vmul.f32 %v670, %v670
        %v770 = vmul.f32 %v671, %v671
        %v771 = vadd.f32 %v739, %v740
        %v772 = vadd.f32 %v771, %v741
        %v773 = vadd.f32 %v772, %v742
        %v774 = vadd.f32 %v773, %v743
        %v775 = vadd.f32 %v774, %v744
        %v776 = vadd.f32 %v775, %v745
        %v777 = vadd.f32 %v776, %v746
        %v778 = vadd.f32 %v777, %v747
        %v779 = vadd.f32 %v778, %v748
        %v780 = vadd.f32 %v779, %v749
        %v781 = vadd.f32 %v780, %v750
        %v782 = vadd.f32 %v781, %v751
        %v783 = vadd.f32 %v782, %v752
        %v784 = vadd.f32 %v783, %v753
        %v785 = vadd.f32 %v784, %v754
        %v786 = vadd.f32 %v785, %v755
        %v787 = vadd.f32 %v786, %v756
        %v788 = vadd.f32 %v787, %v757
        %v789 = vadd.f32 %v788, %v758
        %v790 = vadd.f32 %v789, %v759
        %v791 = vadd.f32 %v790, %v760
        %v792 = vadd.f32 %v791, %v761
        %v793 = vadd.f32 %v792, %v762
        %v794 = vadd.f32 %v793, %v763
        %v795 = vadd.f32 %v794, %v764
        %v796 = vadd.f32 %v795, %v765
        %v797 = vadd.f32 %v796, %v766
        %v798 = vadd.f32 %v797, %v767
        %v799 = vadd.f32 %v798, %v768
        %v800 = vadd.f32 %v799, %v769
        %v801 = vadd.f32 %v800, %v770
        %v802 = vadd.f32 %v738, %v801
        %803 = vst [vmem:[%s3 + $0x8] sm:$0xff] %v802
      $region40: #{_lambda_.4} parent=27 // pred_fallthru
        _
      %s804 = smul.u32 32, %s19
      %p805 = scmp.lt.s32.totalorder %s804, 63
      %s806 = scalar_select %p805, %s804, 63
      %s807 = smul.addr %s806, 8
      %s808 = scalar_lea.vmem %s2, %s807
      // Predicated region
      $region41: #{_lambda_.4} parent=27 // pred_check
        %p809 = pneg %p99
      $region42: #{_lambda_.4} parent=27 // pred_check_branch
        %811 = sbr.rel (%p809) target = $region44
      $region43: #{_lambda_.4} parent=27 // pred_region
        %s812 = smul.u32 32, %s19
      $region44: #{_lambda_.4} parent=27 // pred_fallthru
        _
      // Predicated region
      $region45: #{_lambda_.4} parent=27 // pred_check
        %p813 = pneg %p120
      $region46: #{_lambda_.4} parent=27 // pred_check_branch
        %815 = sbr.rel (%p813) target = $region48
      $region47: #{_lambda_.4} parent=27 // pred_region
        _
      $region48: #{_lambda_.4} parent=27 // pred_fallthru
        _
      // Predicated region
      $region49: #{_lambda_.4} parent=27 // pred_check
        %p816 = pneg %p120
      $region50: #{_lambda_.4} parent=27 // pred_check_branch
        %818 = sbr.rel (%p816) target = $region52
      $region51: #{_lambda_.4} parent=27 // pred_region
        _
      $region52: #{_lambda_.4} parent=27 // pred_fallthru
        _
    $region28: #{_lambda_.4} parent=5 // pred_fallthru
      _
    %p819 = scmp.le.s32.totalorder 2, %s10
    // Predicated region
    $region53: #{_lambda_.4} parent=5 // pred_check
      %p820 = pneg %p819
    $region54: #{_lambda_.4} parent=5 // pred_check_branch
      %822 = sbr.rel (%p820) target = $region56
    $region55: #{_lambda_.4} parent=5 // pred_region
      %s823 = ssub.s32 %s10, 2
      // Predicated region
      $region57: #{_lambda_.4} parent=55 // pred_check
        %p824 = pneg %p105
      $region58: #{_lambda_.4} parent=55 // pred_check_branch
        %826 = sbr.rel (%p824) target = $region60
      $region59: #{_lambda_.4} parent=55 // pred_region
        %s827 = smul.u32 32, %s21
        %p828 = scmp.lt.s32.totalorder %s827, 63
        %s829 = scalar_select %p828, %s827, 63
        %s830 = smul.addr %s829, 8
        %s831 = scalar_lea.vmem %s2, %s830
      $region60: #{_lambda_.4} parent=55 // pred_fallthru
        _
    $region56: #{_lambda_.4} parent=5 // pred_fallthru
      _
  $region6: #{_lambda_.4} parent=0 // loop_footer
    %s14 = sadd.s32 1, %s10
  $region7: #{_lambda_.4} parent=0 // loop_footer_branch
    %9 = sbr.rel target = $region3
  $region8: #{_lambda_.4} parent=0 // loop_exit
    _

// kernel: _lambda_.7
$region0: #{_lambda_.7}
  #allocation0 [shape = 'u32[]', space=smem, size = 0x4, offset = 0x4, fixed_abs, tag = 'smem constant byte address 0x4 - core index']
  #allocation1 [shape = 'u32[72,128]{1,0:T(1,128)}', space=vmem, size = 0x9000, scoped, tag = 'internal scratch']
  %s0 = inlined_call_operand.vmem [shape: f32[512,128], index: 0, kind: input, shape index: {}]
  %s1 = inlined_call_operand.vmem [shape: f32[1,128], index: 1, kind: input, shape index: {}]
  %s2 = inlined_call_operand.vmem [shape: f32[1,128], index: 2, kind: input, shape index: {}]
  %s3 = inlined_call_operand.vmem [shape: f32[512,128], index: 3, kind: input, shape index: {}]
  %s4 = inlined_call_operand.vmem [shape: f32[512,128], index: 4, kind: output, shape index: {}]
  %s5 = sld [smem:[#allocation0]]
  $region26: #{_lambda_.7} parent=0
    _
  %s7 = ssub.s32 1, %s5
  %s8 = scalar_select 0, %s7, %s5
  // Predicated region
  $region2: #{_lambda_.7} parent=0 // pred_check
    _
  $region3: #{_lambda_.7} parent=0 // pred_check_branch
    %10 = sbr.rel (0) target = $region5
  $region4: #{_lambda_.7} parent=0 // pred_region
    _
  $region5: #{_lambda_.7} parent=0 // pred_fallthru
    _
  // Predicated region
  $region6: #{_lambda_.7} parent=0 // pred_check
    _
  $region7: #{_lambda_.7} parent=0 // pred_check_branch
    %12 = sbr.rel (0) target = $region9
  $region8: #{_lambda_.7} parent=0 // pred_region
    _
  $region9: #{_lambda_.7} parent=0 // pred_fallthru
    _
  // Predicated region
  $region10: #{_lambda_.7} parent=0 // pred_check
    _
  $region11: #{_lambda_.7} parent=0 // pred_check_branch
    %14 = sbr.rel (0) target = $region13
  $region12: #{_lambda_.7} parent=0 // pred_region
    _
  $region13: #{_lambda_.7} parent=0 // pred_fallthru
    _
  // Predicated region
  $region14: #{_lambda_.7} parent=0 // pred_check
    _
  $region15: #{_lambda_.7} parent=0 // pred_check_branch
    %16 = sbr.rel (0) target = $region17
  $region16: #{_lambda_.7} parent=0 // pred_region
    _
  $region17: #{_lambda_.7} parent=0 // pred_fallthru
    _
  %v17 = vld [vmem:[%s0] sm:$0xff]
  %v18 = vld [vmem:[%s0 + $0x8] sm:$0xff]
  %v19 = vld [vmem:[%s0 + $0x10] sm:$0xff]
  %v20 = vld [vmem:[%s0 + $0x18] sm:$0xff]
  %v21 = vld [vmem:[%s0 + $0x20] sm:$0xff]
  %v22 = vld [vmem:[%s0 + $0x28] sm:$0xff]
  %v23 = vld [vmem:[%s0 + $0x30] sm:$0xff]
  %v24 = vld [vmem:[%s0 + $0x38] sm:$0xff]
  %v25 = vld [vmem:[%s0 + $0x40] sm:$0xff]
  %v26 = vld [vmem:[%s0 + $0x48] sm:$0xff]
  %v27 = vld [vmem:[%s0 + $0x50] sm:$0xff]
  %v28 = vld [vmem:[%s0 + $0x58] sm:$0xff]
  %v29 = vld [vmem:[%s0 + $0x60] sm:$0xff]
  %v30 = vld [vmem:[%s0 + $0x68] sm:$0xff]
  %v31 = vld [vmem:[%s0 + $0x70] sm:$0xff]
  %v32 = vld [vmem:[%s0 + $0x78] sm:$0xff]
  %v33 = vld [vmem:[%s0 + $0x80] sm:$0xff]
  %v34 = vld [vmem:[%s0 + $0x88] sm:$0xff]
  %v35 = vld [vmem:[%s0 + $0x90] sm:$0xff]
  %v36 = vld [vmem:[%s0 + $0x98] sm:$0xff]
  %v37 = vld [vmem:[%s0 + $0xa0] sm:$0xff]
  %v38 = vld [vmem:[%s0 + $0xa8] sm:$0xff]
  %v39 = vld [vmem:[%s0 + $0xb0] sm:$0xff]
  %v40 = vld [vmem:[%s0 + $0xb8] sm:$0xff]
  %v41 = vld [vmem:[%s0 + $0xc0] sm:$0xff]
  %v42 = vld [vmem:[%s0 + $0xc8] sm:$0xff]
  %v43 = vld [vmem:[%s0 + $0xd0] sm:$0xff]
  %v44 = vld [vmem:[%s0 + $0xd8] sm:$0xff]
  %v45 = vld [vmem:[%s0 + $0xe0] sm:$0xff]
  %v46 = vld [vmem:[%s0 + $0xe8] sm:$0xff]
  %v47 = vld [vmem:[%s0 + $0xf0] sm:$0xff]
  %v48 = vld [vmem:[%s0 + $0xf8] sm:$0xff]
  %v49 = vld [vmem:[%s0 + $0x100] sm:$0xff]
  %v50 = vld [vmem:[%s0 + $0x108] sm:$0xff]
  %v51 = vld [vmem:[%s0 + $0x110] sm:$0xff]
  %v52 = vld [vmem:[%s0 + $0x118] sm:$0xff]
  %v53 = vld [vmem:[%s0 + $0x120] sm:$0xff]
  %v54 = vld [vmem:[%s0 + $0x128] sm:$0xff]
  %v55 = vld [vmem:[%s0 + $0x130] sm:$0xff]
  %v56 = vld [vmem:[%s0 + $0x138] sm:$0xff]
  %v57 = vld [vmem:[%s0 + $0x140] sm:$0xff]
  %v58 = vld [vmem:[%s0 + $0x148] sm:$0xff]
  %v59 = vld [vmem:[%s0 + $0x150] sm:$0xff]
  %v60 = vld [vmem:[%s0 + $0x158] sm:$0xff]
  %v61 = vld [vmem:[%s0 + $0x160] sm:$0xff]
  %v62 = vld [vmem:[%s0 + $0x168] sm:$0xff]
  %v63 = vld [vmem:[%s0 + $0x170] sm:$0xff]
  %v64 = vld [vmem:[%s0 + $0x178] sm:$0xff]
  %v65 = vld [vmem:[%s0 + $0x180] sm:$0xff]
  %v66 = vld [vmem:[%s0 + $0x188] sm:$0xff]
  %v67 = vld [vmem:[%s0 + $0x190] sm:$0xff]
  %v68 = vld [vmem:[%s0 + $0x198] sm:$0xff]
  %v69 = vld [vmem:[%s0 + $0x1a0] sm:$0xff]
  %v70 = vld [vmem:[%s0 + $0x1a8] sm:$0xff]
  %v71 = vld [vmem:[%s0 + $0x1b0] sm:$0xff]
  %v72 = vld [vmem:[%s0 + $0x1b8] sm:$0xff]
  %v73 = vld [vmem:[%s0 + $0x1c0] sm:$0xff]
  %v74 = vld [vmem:[%s0 + $0x1c8] sm:$0xff]
  %v75 = vld [vmem:[%s0 + $0x1d0] sm:$0xff]
  %v76 = vld [vmem:[%s0 + $0x1d8] sm:$0xff]
  %v77 = vld [vmem:[%s0 + $0x1e0] sm:$0xff]
  %v78 = vld [vmem:[%s0 + $0x1e8] sm:$0xff]
  %v79 = vld [vmem:[%s0 + $0x1f0] sm:$0xff]
  %v80 = vld [vmem:[%s0 + $0x1f8] sm:$0xff]
  %v81 = vld [vmem:[%s1] sm:$0x1]
  %v83 = vperm.slane %v81, 0
  %v85 = vmul.f32 %v17, %v83
  %v86 = vmul.f32 %v18, %v83
  %v87 = vmul.f32 %v19, %v83
  %v88 = vmul.f32 %v20, %v83
  %v89 = vmul.f32 %v21, %v83
  %v90 = vmul.f32 %v22, %v83
  %v91 = vmul.f32 %v23, %v83
  %v92 = vmul.f32 %v24, %v83
  %v93 = vmul.f32 %v25, %v83
  %v94 = vmul.f32 %v26, %v83
  %v95 = vmul.f32 %v27, %v83
  %v96 = vmul.f32 %v28, %v83
  %v97 = vmul.f32 %v29, %v83
  %v98 = vmul.f32 %v30, %v83
  %v99 = vmul.f32 %v31, %v83
  %v100 = vmul.f32 %v32, %v83
  %v101 = vmul.f32 %v33, %v83
  %v102 = vmul.f32 %v34, %v83
  %v103 = vmul.f32 %v35, %v83
  %v104 = vmul.f32 %v36, %v83
  %v105 = vmul.f32 %v37, %v83
  %v106 = vmul.f32 %v38, %v83
  %v107 = vmul.f32 %v39, %v83
  %v108 = vmul.f32 %v40, %v83
  %v109 = vmul.f32 %v41, %v83
  %v110 = vmul.f32 %v42, %v83
  %v111 = vmul.f32 %v43, %v83
  %v112 = vmul.f32 %v44, %v83
  %v113 = vmul.f32 %v45, %v83
  %v114 = vmul.f32 %v46, %v83
  %v115 = vmul.f32 %v47, %v83
  %v116 = vmul.f32 %v48, %v83
  %v117 = vmul.f32 %v49, %v83
  %v118 = vmul.f32 %v50, %v83
  %v119 = vmul.f32 %v51, %v83
  %v120 = vmul.f32 %v52, %v83
  %v121 = vmul.f32 %v53, %v83
  %v122 = vmul.f32 %v54, %v83
  %v123 = vmul.f32 %v55, %v83
  %v124 = vmul.f32 %v56, %v83
  %v125 = vmul.f32 %v57, %v83
  %v126 = vmul.f32 %v58, %v83
  %v127 = vmul.f32 %v59, %v83
  %v128 = vmul.f32 %v60, %v83
  %v129 = vmul.f32 %v61, %v83
  %v130 = vmul.f32 %v62, %v83
  %v131 = vmul.f32 %v63, %v83
  %v132 = vmul.f32 %v64, %v83
  %v133 = vmul.f32 %v65, %v83
  %v134 = vmul.f32 %v66, %v83
  %v135 = vmul.f32 %v67, %v83
  %v136 = vmul.f32 %v68, %v83
  %v137 = vmul.f32 %v69, %v83
  %v138 = vmul.f32 %v70, %v83
  %v139 = vmul.f32 %v71, %v83
  %v140 = vmul.f32 %v72, %v83
  %v141 = vmul.f32 %v73, %v83
  %v142 = vmul.f32 %v74, %v83
  %v143 = vmul.f32 %v75, %v83
  %v144 = vmul.f32 %v76, %v83
  %v145 = vmul.f32 %v77, %v83
  %v146 = vmul.f32 %v78, %v83
  %v147 = vmul.f32 %v79, %v83
  %v148 = vmul.f32 %v80, %v83
  %v149 = vld [vmem:[%s2] sm:$0x1]
  %v151 = vperm.slane %v149, 0
  %v153 = vadd.f32 %v85, %v151
  %v154 = vadd.f32 %v86, %v151
  %v155 = vadd.f32 %v87, %v151
  %v156 = vadd.f32 %v88, %v151
  %v157 = vadd.f32 %v89, %v151
  %v158 = vadd.f32 %v90, %v151
  %v159 = vadd.f32 %v91, %v151
  %v160 = vadd.f32 %v92, %v151
  %v161 = vadd.f32 %v93, %v151
  %v162 = vadd.f32 %v94, %v151
  %v163 = vadd.f32 %v95, %v151
  %v164 = vadd.f32 %v96, %v151
  %v165 = vadd.f32 %v97, %v151
  %v166 = vadd.f32 %v98, %v151
  %v167 = vadd.f32 %v99, %v151
  %v168 = vadd.f32 %v100, %v151
  %v169 = vadd.f32 %v101, %v151
  %v170 = vadd.f32 %v102, %v151
  %v171 = vadd.f32 %v103, %v151
  %v172 = vadd.f32 %v104, %v151
  %v173 = vadd.f32 %v105, %v151
  %v174 = vadd.f32 %v106, %v151
  %v175 = vadd.f32 %v107, %v151
  %v176 = vadd.f32 %v108, %v151
  %v177 = vadd.f32 %v109, %v151
  %v178 = vadd.f32 %v110, %v151
  %v179 = vadd.f32 %v111, %v151
  %v180 = vadd.f32 %v112, %v151
  %v181 = vadd.f32 %v113, %v151
  %v182 = vadd.f32 %v114, %v151
  %v183 = vadd.f32 %v115, %v151
  %v184 = vadd.f32 %v116, %v151
  %v185 = vadd.f32 %v117, %v151
  %v186 = vadd.f32 %v118, %v151
  %v187 = vadd.f32 %v119, %v151
  %v188 = vadd.f32 %v120, %v151
  %v189 = vadd.f32 %v121, %v151
  %v190 = vadd.f32 %v122, %v151
  %v191 = vadd.f32 %v123, %v151
  %v192 = vadd.f32 %v124, %v151
  %v193 = vadd.f32 %v125, %v151
  %v194 = vadd.f32 %v126, %v151
  %v195 = vadd.f32 %v127, %v151
  %v196 = vadd.f32 %v128, %v151
  %v197 = vadd.f32 %v129, %v151
  %v198 = vadd.f32 %v130, %v151
  %v199 = vadd.f32 %v131, %v151
  %v200 = vadd.f32 %v132, %v151
  %v201 = vadd.f32 %v133, %v151
  %v202 = vadd.f32 %v134, %v151
  %v203 = vadd.f32 %v135, %v151
  %v204 = vadd.f32 %v136, %v151
  %v205 = vadd.f32 %v137, %v151
  %v206 = vadd.f32 %v138, %v151
  %v207 = vadd.f32 %v139, %v151
  %v208 = vadd.f32 %v140, %v151
  %v209 = vadd.f32 %v141, %v151
  %v210 = vadd.f32 %v142, %v151
  %v211 = vadd.f32 %v143, %v151
  %v212 = vadd.f32 %v144, %v151
  %v213 = vadd.f32 %v145, %v151
  %v214 = vadd.f32 %v146, %v151
  %v215 = vadd.f32 %v147, %v151
  %v216 = vadd.f32 %v148, %v151
  %v217 = vld [vmem:[%s3] sm:$0xff]
  %v218 = vld [vmem:[%s3 + $0x8] sm:$0xff]
  %v219 = vld [vmem:[%s3 + $0x10] sm:$0xff]
  %v220 = vld [vmem:[%s3 + $0x18] sm:$0xff]
  %v221 = vld [vmem:[%s3 + $0x20] sm:$0xff]
  %v222 = vld [vmem:[%s3 + $0x28] sm:$0xff]
  %v223 = vld [vmem:[%s3 + $0x30] sm:$0xff]
  %v224 = vld [vmem:[%s3 + $0x38] sm:$0xff]
  %v225 = vld [vmem:[%s3 + $0x40] sm:$0xff]
  %v226 = vld [vmem:[%s3 + $0x48] sm:$0xff]
  %v227 = vld [vmem:[%s3 + $0x50] sm:$0xff]
  %v228 = vld [vmem:[%s3 + $0x58] sm:$0xff]
  %v229 = vld [vmem:[%s3 + $0x60] sm:$0xff]
  %v230 = vld [vmem:[%s3 + $0x68] sm:$0xff]
  %v231 = vld [vmem:[%s3 + $0x70] sm:$0xff]
  %v232 = vld [vmem:[%s3 + $0x78] sm:$0xff]
  %v233 = vld [vmem:[%s3 + $0x80] sm:$0xff]
  %v234 = vld [vmem:[%s3 + $0x88] sm:$0xff]
  %v235 = vld [vmem:[%s3 + $0x90] sm:$0xff]
  %v236 = vld [vmem:[%s3 + $0x98] sm:$0xff]
  %v237 = vld [vmem:[%s3 + $0xa0] sm:$0xff]
  %v238 = vld [vmem:[%s3 + $0xa8] sm:$0xff]
  %v239 = vld [vmem:[%s3 + $0xb0] sm:$0xff]
  %v240 = vld [vmem:[%s3 + $0xb8] sm:$0xff]
  %v241 = vld [vmem:[%s3 + $0xc0] sm:$0xff]
  %v242 = vld [vmem:[%s3 + $0xc8] sm:$0xff]
  %v243 = vld [vmem:[%s3 + $0xd0] sm:$0xff]
  %v244 = vld [vmem:[%s3 + $0xd8] sm:$0xff]
  %v245 = vld [vmem:[%s3 + $0xe0] sm:$0xff]
  %v246 = vld [vmem:[%s3 + $0xe8] sm:$0xff]
  %v247 = vld [vmem:[%s3 + $0xf0] sm:$0xff]
  %v248 = vld [vmem:[%s3 + $0xf8] sm:$0xff]
  %v249 = vld [vmem:[%s3 + $0x100] sm:$0xff]
  %v250 = vld [vmem:[%s3 + $0x108] sm:$0xff]
  %v251 = vld [vmem:[%s3 + $0x110] sm:$0xff]
  %v252 = vld [vmem:[%s3 + $0x118] sm:$0xff]
  %v253 = vld [vmem:[%s3 + $0x120] sm:$0xff]
  %v254 = vld [vmem:[%s3 + $0x128] sm:$0xff]
  %v255 = vld [vmem:[%s3 + $0x130] sm:$0xff]
  %v256 = vld [vmem:[%s3 + $0x138] sm:$0xff]
  %v257 = vld [vmem:[%s3 + $0x140] sm:$0xff]
  %v258 = vld [vmem:[%s3 + $0x148] sm:$0xff]
  %v259 = vld [vmem:[%s3 + $0x150] sm:$0xff]
  %v260 = vld [vmem:[%s3 + $0x158] sm:$0xff]
  %v261 = vld [vmem:[%s3 + $0x160] sm:$0xff]
  %v262 = vld [vmem:[%s3 + $0x168] sm:$0xff]
  %v263 = vld [vmem:[%s3 + $0x170] sm:$0xff]
  %v264 = vld [vmem:[%s3 + $0x178] sm:$0xff]
  %v265 = vld [vmem:[%s3 + $0x180] sm:$0xff]
  %v266 = vld [vmem:[%s3 + $0x188] sm:$0xff]
  %v267 = vld [vmem:[%s3 + $0x190] sm:$0xff]
  %v268 = vld [vmem:[%s3 + $0x198] sm:$0xff]
  %v269 = vld [vmem:[%s3 + $0x1a0] sm:$0xff]
  %v270 = vld [vmem:[%s3 + $0x1a8] sm:$0xff]
  %v271 = vld [vmem:[%s3 + $0x1b0] sm:$0xff]
  %v272 = vld [vmem:[%s3 + $0x1b8] sm:$0xff]
  %v273 = vld [vmem:[%s3 + $0x1c0] sm:$0xff]
  %v274 = vld [vmem:[%s3 + $0x1c8] sm:$0xff]
  %v275 = vld [vmem:[%s3 + $0x1d0] sm:$0xff]
  %v276 = vld [vmem:[%s3 + $0x1d8] sm:$0xff]
  %v277 = vld [vmem:[%s3 + $0x1e0] sm:$0xff]
  %v278 = vld [vmem:[%s3 + $0x1e8] sm:$0xff]
  %v279 = vld [vmem:[%s3 + $0x1f0] sm:$0xff]
  %v280 = vld [vmem:[%s3 + $0x1f8] sm:$0xff]
  %v281 = vadd.f32 %v153, %v217
  %v282 = vadd.f32 %v154, %v218
  %v283 = vadd.f32 %v155, %v219
  %v284 = vadd.f32 %v156, %v220
  %v285 = vadd.f32 %v157, %v221
  %v286 = vadd.f32 %v158, %v222
  %v287 = vadd.f32 %v159, %v223
  %v288 = vadd.f32 %v160, %v224
  %v289 = vadd.f32 %v161, %v225
  %v290 = vadd.f32 %v162, %v226
  %v291 = vadd.f32 %v163, %v227
  %v292 = vadd.f32 %v164, %v228
  %v293 = vadd.f32 %v165, %v229
  %v294 = vadd.f32 %v166, %v230
  %v295 = vadd.f32 %v167, %v231
  %v296 = vadd.f32 %v168, %v232
  %v297 = vadd.f32 %v169, %v233
  %v298 = vadd.f32 %v170, %v234
  %v299 = vadd.f32 %v171, %v235
  %v300 = vadd.f32 %v172, %v236
  %v301 = vadd.f32 %v173, %v237
  %v302 = vadd.f32 %v174, %v238
  %v303 = vadd.f32 %v175, %v239
  %v304 = vadd.f32 %v176, %v240
  %v305 = vadd.f32 %v177, %v241
  %v306 = vadd.f32 %v178, %v242
  %v307 = vadd.f32 %v179, %v243
  %v308 = vadd.f32 %v180, %v244
  %v309 = vadd.f32 %v181, %v245
  %v310 = vadd.f32 %v182, %v246
  %v311 = vadd.f32 %v183, %v247
  %v312 = vadd.f32 %v184, %v248
  %v313 = vadd.f32 %v185, %v249
  %v314 = vadd.f32 %v186, %v250
  %v315 = vadd.f32 %v187, %v251
  %v316 = vadd.f32 %v188, %v252
  %v317 = vadd.f32 %v189, %v253
  %v318 = vadd.f32 %v190, %v254
  %v319 = vadd.f32 %v191, %v255
  %v320 = vadd.f32 %v192, %v256
  %v321 = vadd.f32 %v193, %v257
  %v322 = vadd.f32 %v194, %v258
  %v323 = vadd.f32 %v195, %v259
  %v324 = vadd.f32 %v196, %v260
  %v325 = vadd.f32 %v197, %v261
  %v326 = vadd.f32 %v198, %v262
  %v327 = vadd.f32 %v199, %v263
  %v328 = vadd.f32 %v200, %v264
  %v329 = vadd.f32 %v201, %v265
  %v330 = vadd.f32 %v202, %v266
  %v331 = vadd.f32 %v203, %v267
  %v332 = vadd.f32 %v204, %v268
  %v333 = vadd.f32 %v205, %v269
  %v334 = vadd.f32 %v206, %v270
  %v335 = vadd.f32 %v207, %v271
  %v336 = vadd.f32 %v208, %v272
  %v337 = vadd.f32 %v209, %v273
  %v338 = vadd.f32 %v210, %v274
  %v339 = vadd.f32 %v211, %v275
  %v340 = vadd.f32 %v212, %v276
  %v341 = vadd.f32 %v213, %v277
  %v342 = vadd.f32 %v214, %v278
  %v343 = vadd.f32 %v215, %v279
  %v344 = vadd.f32 %v216, %v280
  %v345 = vmax.f32 %v281, 0.0
  %v346 = vmax.f32 %v282, 0.0
  %v347 = vmax.f32 %v283, 0.0
  %v348 = vmax.f32 %v284, 0.0
  %v349 = vmax.f32 %v285, 0.0
  %v350 = vmax.f32 %v286, 0.0
  %v351 = vmax.f32 %v287, 0.0
  %v352 = vmax.f32 %v288, 0.0
  %v353 = vmax.f32 %v289, 0.0
  %v354 = vmax.f32 %v290, 0.0
  %v355 = vmax.f32 %v291, 0.0
  %v356 = vmax.f32 %v292, 0.0
  %v357 = vmax.f32 %v293, 0.0
  %v358 = vmax.f32 %v294, 0.0
  %v359 = vmax.f32 %v295, 0.0
  %v360 = vmax.f32 %v296, 0.0
  %v361 = vmax.f32 %v297, 0.0
  %v362 = vmax.f32 %v298, 0.0
  %v363 = vmax.f32 %v299, 0.0
  %v364 = vmax.f32 %v300, 0.0
  %v365 = vmax.f32 %v301, 0.0
  %v366 = vmax.f32 %v302, 0.0
  %v367 = vmax.f32 %v303, 0.0
  %v368 = vmax.f32 %v304, 0.0
  %v369 = vmax.f32 %v305, 0.0
  %v370 = vmax.f32 %v306, 0.0
  %v371 = vmax.f32 %v307, 0.0
  %v372 = vmax.f32 %v308, 0.0
  %v373 = vmax.f32 %v309, 0.0
  %v374 = vmax.f32 %v310, 0.0
  %v375 = vmax.f32 %v311, 0.0
  %v376 = vmax.f32 %v312, 0.0
  %v377 = vmax.f32 %v313, 0.0
  %v378 = vmax.f32 %v314, 0.0
  %v379 = vmax.f32 %v315, 0.0
  %v380 = vmax.f32 %v316, 0.0
  %v381 = vmax.f32 %v317, 0.0
  %v382 = vmax.f32 %v318, 0.0
  %v383 = vmax.f32 %v319, 0.0
  %v384 = vmax.f32 %v320, 0.0
  %v385 = vmax.f32 %v321, 0.0
  %v386 = vmax.f32 %v322, 0.0
  %v387 = vmax.f32 %v323, 0.0
  %v388 = vmax.f32 %v324, 0.0
  %v389 = vmax.f32 %v325, 0.0
  %v390 = vmax.f32 %v326, 0.0
  %v391 = vmax.f32 %v327, 0.0
  %v392 = vmax.f32 %v328, 0.0
  %v393 = vmax.f32 %v329, 0.0
  %v394 = vmax.f32 %v330, 0.0
  %v395 = vmax.f32 %v331, 0.0
  %v396 = vmax.f32 %v332, 0.0
  %v397 = vmax.f32 %v333, 0.0
  %v398 = vmax.f32 %v334, 0.0
  %v399 = vmax.f32 %v335, 0.0
  %v400 = vmax.f32 %v336, 0.0
  %v401 = vmax.f32 %v337, 0.0
  %v402 = vmax.f32 %v338, 0.0
  %v403 = vmax.f32 %v339, 0.0
  %v404 = vmax.f32 %v340, 0.0
  %v405 = vmax.f32 %v341, 0.0
  %v406 = vmax.f32 %v342, 0.0
  %v407 = vmax.f32 %v343, 0.0
  %v408 = vmax.f32 %v344, 0.0
  %409 = vst [vmem:[%s4] sm:$0xff] %v345
  %410 = vst [vmem:[%s4 + $0x8] sm:$0xff] %v346
  %411 = vst [vmem:[%s4 + $0x10] sm:$0xff] %v347
  %412 = vst [vmem:[%s4 + $0x18] sm:$0xff] %v348
  %413 = vst [vmem:[%s4 + $0x20] sm:$0xff] %v349
  %414 = vst [vmem:[%s4 + $0x28] sm:$0xff] %v350
  %415 = vst [vmem:[%s4 + $0x30] sm:$0xff] %v351
  %416 = vst [vmem:[%s4 + $0x38] sm:$0xff] %v352
  %417 = vst [vmem:[%s4 + $0x40] sm:$0xff] %v353
  %418 = vst [vmem:[%s4 + $0x48] sm:$0xff] %v354
  %419 = vst [vmem:[%s4 + $0x50] sm:$0xff] %v355
  %420 = vst [vmem:[%s4 + $0x58] sm:$0xff] %v356
  %421 = vst [vmem:[%s4 + $0x60] sm:$0xff] %v357
  %422 = vst [vmem:[%s4 + $0x68] sm:$0xff] %v358
  %423 = vst [vmem:[%s4 + $0x70] sm:$0xff] %v359
  %424 = vst [vmem:[%s4 + $0x78] sm:$0xff] %v360
  %425 = vst [vmem:[%s4 + $0x80] sm:$0xff] %v361
  %426 = vst [vmem:[%s4 + $0x88] sm:$0xff] %v362
  %427 = vst [vmem:[%s4 + $0x90] sm:$0xff] %v363
  %428 = vst [vmem:[%s4 + $0x98] sm:$0xff] %v364
  %429 = vst [vmem:[%s4 + $0xa0] sm:$0xff] %v365
  %430 = vst [vmem:[%s4 + $0xa8] sm:$0xff] %v366
  %431 = vst [vmem:[%s4 + $0xb0] sm:$0xff] %v367
  %432 = vst [vmem:[%s4 + $0xb8] sm:$0xff] %v368
  %433 = vst [vmem:[%s4 + $0xc0] sm:$0xff] %v369
  %434 = vst [vmem:[%s4 + $0xc8] sm:$0xff] %v370
  %435 = vst [vmem:[%s4 + $0xd0] sm:$0xff] %v371
  %436 = vst [vmem:[%s4 + $0xd8] sm:$0xff] %v372
  %437 = vst [vmem:[%s4 + $0xe0] sm:$0xff] %v373
  %438 = vst [vmem:[%s4 + $0xe8] sm:$0xff] %v374
  %439 = vst [vmem:[%s4 + $0xf0] sm:$0xff] %v375
  %440 = vst [vmem:[%s4 + $0xf8] sm:$0xff] %v376
  %441 = vst [vmem:[%s4 + $0x100] sm:$0xff] %v377
  %442 = vst [vmem:[%s4 + $0x108] sm:$0xff] %v378
  %443 = vst [vmem:[%s4 + $0x110] sm:$0xff] %v379
  %444 = vst [vmem:[%s4 + $0x118] sm:$0xff] %v380
  %445 = vst [vmem:[%s4 + $0x120] sm:$0xff] %v381
  %446 = vst [vmem:[%s4 + $0x128] sm:$0xff] %v382
  %447 = vst [vmem:[%s4 + $0x130] sm:$0xff] %v383
  %448 = vst [vmem:[%s4 + $0x138] sm:$0xff] %v384
  %449 = vst [vmem:[%s4 + $0x140] sm:$0xff] %v385
  %450 = vst [vmem:[%s4 + $0x148] sm:$0xff] %v386
  %451 = vst [vmem:[%s4 + $0x150] sm:$0xff] %v387
  %452 = vst [vmem:[%s4 + $0x158] sm:$0xff] %v388
  %453 = vst [vmem:[%s4 + $0x160] sm:$0xff] %v389
  %454 = vst [vmem:[%s4 + $0x168] sm:$0xff] %v390
  %455 = vst [vmem:[%s4 + $0x170] sm:$0xff] %v391
  %456 = vst [vmem:[%s4 + $0x178] sm:$0xff] %v392
  %457 = vst [vmem:[%s4 + $0x180] sm:$0xff] %v393
  %458 = vst [vmem:[%s4 + $0x188] sm:$0xff] %v394
  %459 = vst [vmem:[%s4 + $0x190] sm:$0xff] %v395
  %460 = vst [vmem:[%s4 + $0x198] sm:$0xff] %v396
  %461 = vst [vmem:[%s4 + $0x1a0] sm:$0xff] %v397
  %462 = vst [vmem:[%s4 + $0x1a8] sm:$0xff] %v398
  %463 = vst [vmem:[%s4 + $0x1b0] sm:$0xff] %v399
  %464 = vst [vmem:[%s4 + $0x1b8] sm:$0xff] %v400
  %465 = vst [vmem:[%s4 + $0x1c0] sm:$0xff] %v401
  %466 = vst [vmem:[%s4 + $0x1c8] sm:$0xff] %v402
  %467 = vst [vmem:[%s4 + $0x1d0] sm:$0xff] %v403
  %468 = vst [vmem:[%s4 + $0x1d8] sm:$0xff] %v404
  %469 = vst [vmem:[%s4 + $0x1e0] sm:$0xff] %v405
  %470 = vst [vmem:[%s4 + $0x1e8] sm:$0xff] %v406
  %471 = vst [vmem:[%s4 + $0x1f0] sm:$0xff] %v407
  %472 = vst [vmem:[%s4 + $0x1f8] sm:$0xff] %v408
  // Predicated region
  $region18: #{_lambda_.7} parent=0 // pred_check
    _
  $region19: #{_lambda_.7} parent=0 // pred_check_branch
    %474 = sbr.rel (0) target = $region21
  $region20: #{_lambda_.7} parent=0 // pred_region
    _
  $region21: #{_lambda_.7} parent=0 // pred_fallthru
    _
  // Predicated region
  $region22: #{_lambda_.7} parent=0 // pred_check
    _
  $region23: #{_lambda_.7} parent=0 // pred_check_branch
    %476 = sbr.rel (0) target = $region25
  $region24: #{_lambda_.7} parent=0 // pred_region
    _
  $region25: #{_lambda_.7} parent=0 // pred_fallthru
    _

</llo_original>
